<compile_context>
chip_gen: v7x
topology: tpu7x:2x2x1
jax: 0.10.0
libtpu: 0.0.40
codegen_flags: <defaults>
</compile_context>

<pallas_src>
import functools

import jax
import jax.numpy as jnp
from jax.experimental import pallas as pl
from jax.experimental.pallas import tpu as pltpu


def _gate_kernel(eo_ref, xt_ref, w0_ref, sb0_ref, w1_ref, sb1_ref, esa_ref,
                 out_ref, *, Bb, Ho, Wo, Cin, C):
    rows = Bb * Ho * Wo

    # ---- MaxPool2d(kernel=3, stride=2, padding=1) ---------------------------
    # eo holds the (-inf)-padded input split into its 4 even/odd row/col
    # phases: eo[b, 2*pi+pj, i, j, c] == x_pad[b, 2*i+pi, 2*j+pj, c].
    # Tap (di, dj) of the 3x3/stride-2 window is then the CONTIGUOUS slice
    # eo[:, 2*(di&1)+(dj&1), di>>1 : di>>1+Ho, dj>>1 : dj>>1+Wo, :].
    eo = eo_ref[...]                                    # (Bb, 4, Ho+1, Wo+1, Cin)
    m = None
    for di in range(3):
        pi, oi = di & 1, di >> 1
        for dj in range(3):
            pj, oj = dj & 1, dj >> 1
            tap = eo[:, 2 * pi + pj, oi:oi + Ho, oj:oj + Wo, :]
            m = tap if m is None else jnp.maximum(m, tap)

    # ---- conv0: 1x1 conv (Cin -> C) + folded BN + ReLU, then skip add -------
    sb0 = sb0_ref[...]
    h = jnp.dot(m.reshape(rows, Cin), w0_ref[...],
                preferred_element_type=jnp.float32)      # (rows, C)
    h = jnp.maximum(h * sb0[0:1, :] + sb0[1:2, :], 0.0)
    h = h + xt_ref[...].reshape(rows, C)

    # ---- concat: 3x3 conv (C -> C, pad 1) as ONE im2col matmul (K = 9*C) ----
    h4 = h.reshape(Bb, Ho, Wo, C)
    zr = jnp.zeros((Bb, 1, Wo, C), jnp.float32)
    hp = jnp.concatenate([zr, h4, zr], axis=1)           # (Bb, Ho+2, Wo, C)
    zc = jnp.zeros((Bb, Ho + 2, 1, C), jnp.float32)
    hp = jnp.concatenate([zc, hp, zc], axis=2)           # (Bb, Ho+2, Wo+2, C)
    taps = [hp[:, di:di + Ho, dj:dj + Wo, :].reshape(rows, C)
            for di in range(3) for dj in range(3)]
    lhs = jnp.concatenate(taps, axis=-1)                 # (rows, 9*C)
    sb1 = sb1_ref[...]
    acc = jnp.dot(lhs, w1_ref[...], preferred_element_type=jnp.float32)
    xt2 = jnp.maximum(acc * sb1[0:1, :] + sb1[1:2, :], 0.0)   # (rows, C)

    # ---- ESA: GAP -> 3-tap conv along channels -> sigmoid -> gate -----------
    # esa_ref[k, :] holds w_mid[k] / (Ho*Wo), so a spatial SUM followed by 3
    # shifted multiply-adds reproduces conv(mean).  No MXU pass on this path.
    xt3 = xt2.reshape(Bb, Ho * Wo, C)
    y = jnp.sum(xt3, axis=1)                             # (Bb, C)
    zpad = jnp.zeros((Bb, 1), jnp.float32)
    y_m1 = jnp.concatenate([zpad, y[:, :C - 1]], axis=1)     # y[c-1]
    y_p1 = jnp.concatenate([y[:, 1:], zpad], axis=1)         # y[c+1]
    esa = esa_ref[...]                                   # (3, C)
    z = esa[0:1, :] * y_m1 + esa[1:2, :] * y + esa[2:3, :] * y_p1
    g = 1.0 / (1.0 + jnp.exp(-z))                        # sigmoid, (Bb, C)
    out_ref[...] = (xt3 * g[:, None, :]).reshape(Bb, Ho, Wo, C)


def _pick_batch_block(n, rows_per_image, target_rows=256, max_rows=4096):
    """Smallest divisor of n whose block fills the MXU M-dim (>= target rows),
    capped so the activation block stays comfortably inside VMEM."""
    best = 1
    for bb in range(1, n + 1):
        if n % bb:
            continue
        if bb * rows_per_image > max_rows:
            break
        best = bb
        if bb * rows_per_image >= target_rows:
            break
    return best


def gate_forward(x_t, x, params):
    """x: (N, H, W, 32) NHWC, x_t: (N, H//2, W//2, C) NHWC -> (N, H//2, W//2, C)."""
    N, H, W, Cin = x.shape
    _, Ho, Wo, C = x_t.shape
    assert Cin == 32 and H == 2 * Ho and W == 2 * Wo and x_t.shape[0] == N

    # (-inf)-pad for the maxpool, then split rows/cols into even/odd phases so
    # the kernel never needs a strided load (pure layout plumbing):
    #   eo[n, 2*pi+pj, i, j, c] = x_pad[n, 2*i+pi, 2*j+pj, c]
    xp = jnp.pad(x, ((0, 0), (1, 1), (1, 1), (0, 0)), constant_values=-jnp.inf)
    eo = xp.reshape(N, Ho + 1, 2, Wo + 1, 2, Cin)
    eo = eo.transpose(0, 2, 4, 1, 3, 5).reshape(N, 4, Ho + 1, Wo + 1, Cin)

    # Matmul-ready weights.
    w1f = params["w1"].reshape(9 * C, C)                          # (9*C, C)
    esa_w = jnp.tile((params["esa_mid"] / float(Ho * Wo))[:, None], (1, C))

    Bb = _pick_batch_block(N, Ho * Wo)
    grid = (N // Bb,)

    f32 = 4
    act_bytes = f32 * Bb * (4 * (Ho + 1) * (Wo + 1) * Cin + 2 * Ho * Wo * C)
    wgt_bytes = f32 * (Cin * C + 9 * C * C + 4 * C + 3 * C)
    tmp_bytes = f32 * Bb * Ho * Wo * (9 * C + 6 * C)     # im2col LHS + temporaries
    vmem_limit = int(min(64 * 2 ** 20,
                         2 * (act_bytes + wgt_bytes) + tmp_bytes + (4 << 20)))

    kernel = functools.partial(_gate_kernel, Bb=Bb, Ho=Ho, Wo=Wo, Cin=Cin, C=C)
    return pl.pallas_call(
        kernel,
        out_shape=jax.ShapeDtypeStruct((N, Ho, Wo, C), jnp.float32),
        grid_spec=pltpu.PrefetchScalarGridSpec(
            num_scalar_prefetch=0,
            grid=grid,
            in_specs=[
                pl.BlockSpec((Bb, 4, Ho + 1, Wo + 1, Cin),
                             lambda b: (b, 0, 0, 0, 0)),
                pl.BlockSpec((Bb, Ho, Wo, C), lambda b: (b, 0, 0, 0)),
                pl.BlockSpec((Cin, C), lambda b: (0, 0)),
                pl.BlockSpec((2, C), lambda b: (0, 0)),
                pl.BlockSpec((9 * C, C), lambda b: (0, 0)),
                pl.BlockSpec((2, C), lambda b: (0, 0)),
                pl.BlockSpec((3, C), lambda b: (0, 0)),
            ],
            out_specs=pl.BlockSpec((Bb, Ho, Wo, C), lambda b: (b, 0, 0, 0)),
        ),
        compiler_params=pltpu.CompilerParams(
            dimension_semantics=("parallel",),     # batch blocks are independent
            vmem_limit_bytes=vmem_limit),
    )(eo, x_t, params["w0"], params["sb0"], w1f, params["sb1"], esa_w)


def init_params(key, concat_channels):
    """Deterministic synthetic params matching the PyTorch module's shapes."""
    C = concat_channels
    ks = jax.random.split(key, 11)

    def bn_fold(kg, kb, km, kv, n):
        gamma = 1.0 + 0.1 * jax.random.normal(kg, (n,), jnp.float32)
        beta = 0.1 * jax.random.normal(kb, (n,), jnp.float32)
        mean = 0.05 * jax.random.normal(km, (n,), jnp.float32)
        var = 1.0 + 0.1 * jnp.abs(jax.random.normal(kv, (n,), jnp.float32))
        scale = gamma / jnp.sqrt(var + 1e-5)
        return jnp.stack([scale, beta - mean * scale], axis=0)    # (2, n)

    # conv0: PyTorch weight (C, 32, 1, 1), kaiming_normal(a=1) -> std = 1/sqrt(32)
    w0 = (jax.random.normal(ks[0], (C, 32), jnp.float32) / jnp.sqrt(32.0)).T
    sb0 = bn_fold(ks[1], ks[2], ks[3], ks[4], C)

    # concat: PyTorch weight (C, C, 3, 3) -> taps (kh*kw, C_in, C_out)
    w1_pt = jax.random.normal(ks[5], (C, C, 3, 3), jnp.float32) / jnp.sqrt(9.0 * C)
    w1 = jnp.transpose(w1_pt, (2, 3, 1, 0)).reshape(9, C, C)
    sb1 = bn_fold(ks[6], ks[7], ks[8], ks[9], C)

    # ESA conv: PyTorch weight (1, 1, 3, 3); its input map is (C, 1) spatially,
    # so only the middle kernel column w[:, 1] ever touches real data.
    w_esa_full = jax.random.normal(ks[10], (3, 3), jnp.float32) / 3.0
    esa_mid = w_esa_full[:, 1]                                    # (3,)

    return {"w0": w0, "sb0": sb0, "w1": w1, "sb1": sb1, "esa_mid": esa_mid}


def gate_reference(x_t, x, params):
    """Pure-JAX reference (same NHWC semantics) for verification."""
    N, H, W, Cin = x.shape
    _, Ho, Wo, C = x_t.shape
    xp = jnp.pad(x, ((0, 0), (1, 1), (1, 1), (0, 0)), constant_values=-jnp.inf)
    m = None
    for di in range(3):
        for dj in range(3):
            tap = xp[:, di:di + 2 * Ho:2, dj:dj + 2 * Wo:2, :]
            m = tap if m is None else jnp.maximum(m, tap)
    h = jnp.einsum("nhwc,cd->nhwd", m, params["w0"])
    h = jnp.maximum(h * params["sb0"][0] + params["sb0"][1], 0.0) + x_t
    hp = jnp.pad(h, ((0, 0), (1, 1), (1, 1), (0, 0)))
    acc = jnp.zeros((N, Ho, Wo, C), jnp.float32)
    for t in range(9):
        di, dj = t // 3, t % 3
        acc = acc + jnp.einsum("nhwc,cd->nhwd",
                               hp[:, di:di + Ho, dj:dj + Wo, :], params["w1"][t])
    xt2 = jnp.maximum(acc * params["sb1"][0] + params["sb1"][1], 0.0)
    y = jnp.mean(xt2, axis=(1, 2))                       # (N, C)
    wm = params["esa_mid"]
    yp = jnp.pad(y, ((0, 0), (1, 1)))
    z = wm[0] * yp[:, :C] + wm[1] * yp[:, 1:C + 1] + wm[2] * yp[:, 2:]
    g = jax.nn.sigmoid(z)[:, None, None, :]
    return xt2 * g


if __name__ == "__main__":
    key = jax.random.PRNGKey(0)
    k_params, k_x, k_xt = jax.random.split(key, 3)

    N, H, W = 2, 16, 16
    C = 64  # concat_channels

    # TODO(synk): BatchNorm is reproduced in inference mode (folded scale/bias);
    # training-mode batch statistics are not reproducible in a stateless kernel.
    params = init_params(k_params, C)
    x = jax.random.normal(k_x, (N, H, W, 32), jnp.float32)               # NHWC
    x_t = jax.random.normal(k_xt, (N, H // 2, W // 2, C), jnp.float32)   # NHWC

    out = jax.block_until_ready(gate_forward(x_t, x, params))
    ref = gate_reference(x_t, x, params)

    assert out.shape == (N, H // 2, W // 2, C)
    assert bool(jnp.all(jnp.isfinite(out)))
    assert bool(jnp.allclose(out, ref, rtol=5e-4, atol=5e-4)), "mismatch vs reference"
    print("KERNEL_OK")
</pallas_src>

<mosaic_0001>
module attributes {stable_mosaic.version = 11 : i64} {
  func.func @_gate_kernel(%arg0: i32, %arg1: memref<2x4x9x9x32xf32, #tpu.memory_space<vmem>>, %arg2: memref<2x8x8x64xf32, #tpu.memory_space<vmem>>, %arg3: memref<32x64xf32, #tpu.memory_space<vmem>>, %arg4: memref<2x64xf32, #tpu.memory_space<vmem>>, %arg5: memref<576x64xf32, #tpu.memory_space<vmem>>, %arg6: memref<2x64xf32, #tpu.memory_space<vmem>>, %arg7: memref<3x64xf32, #tpu.memory_space<vmem>>, %arg8: memref<2x8x8x64xf32, #tpu.memory_space<vmem>>) attributes {dimension_semantics = [#tpu.dimension_semantics<parallel>], iteration_bounds = array<i64: 1>, scalar_prefetch = 0 : i64, scratch_operands = 0 : i64, tpu.core_type = #tpu.core_type<tc>, window_params = [{transform_indices = @transform_0, window_bounds = array<i64: 2, 4, 9, 9, 32>}, {transform_indices = @transform_1, window_bounds = array<i64: 2, 8, 8, 64>}, {pipeline_mode = #tpu.pipeline_mode<synchronous>, transform_indices = @transform_2, window_bounds = array<i64: 32, 64>}, {pipeline_mode = #tpu.pipeline_mode<synchronous>, transform_indices = @transform_3, window_bounds = array<i64: 2, 64>}, {pipeline_mode = #tpu.pipeline_mode<synchronous>, transform_indices = @transform_4, window_bounds = array<i64: 576, 64>}, {pipeline_mode = #tpu.pipeline_mode<synchronous>, transform_indices = @transform_5, window_bounds = array<i64: 2, 64>}, {pipeline_mode = #tpu.pipeline_mode<synchronous>, transform_indices = @transform_6, window_bounds = array<i64: 3, 64>}, {transform_indices = @transform_7, window_bounds = array<i64: 2, 8, 8, 64>}]} {
    %c0 = arith.constant 0 : index
    %c0_0 = arith.constant 0 : index
    %c0_1 = arith.constant 0 : index
    %c0_2 = arith.constant 0 : index
    %c0_3 = arith.constant 0 : index
    %0 = vector.load %arg1[%c0, %c0_0, %c0_1, %c0_2, %c0_3] : memref<2x4x9x9x32xf32, #tpu.memory_space<vmem>>, vector<2x4x9x9x32xf32>
    %1 = vector.extract_strided_slice %0 {offsets = [0, 0, 0, 0, 0], sizes = [2, 1, 8, 8, 32], strides = [1, 1, 1, 1, 1]} : vector<2x4x9x9x32xf32> to vector<2x1x8x8x32xf32>
    %2 = vector.shape_cast %1 : vector<2x1x8x8x32xf32> to vector<2x8x8x32xf32>
    %3 = vector.extract_strided_slice %0 {offsets = [0, 1, 0, 0, 0], sizes = [2, 1, 8, 8, 32], strides = [1, 1, 1, 1, 1]} : vector<2x4x9x9x32xf32> to vector<2x1x8x8x32xf32>
    %4 = vector.shape_cast %3 : vector<2x1x8x8x32xf32> to vector<2x8x8x32xf32>
    %5 = arith.maximumf %2, %4 : vector<2x8x8x32xf32>
    %6 = vector.extract_strided_slice %0 {offsets = [0, 0, 0, 1, 0], sizes = [2, 1, 8, 8, 32], strides = [1, 1, 1, 1, 1]} : vector<2x4x9x9x32xf32> to vector<2x1x8x8x32xf32>
    %7 = vector.shape_cast %6 : vector<2x1x8x8x32xf32> to vector<2x8x8x32xf32>
    %8 = arith.maximumf %5, %7 : vector<2x8x8x32xf32>
    %9 = vector.extract_strided_slice %0 {offsets = [0, 2, 0, 0, 0], sizes = [2, 1, 8, 8, 32], strides = [1, 1, 1, 1, 1]} : vector<2x4x9x9x32xf32> to vector<2x1x8x8x32xf32>
    %10 = vector.shape_cast %9 : vector<2x1x8x8x32xf32> to vector<2x8x8x32xf32>
    %11 = arith.maximumf %8, %10 : vector<2x8x8x32xf32>
    %12 = vector.extract_strided_slice %0 {offsets = [0, 3, 0, 0, 0], sizes = [2, 1, 8, 8, 32], strides = [1, 1, 1, 1, 1]} : vector<2x4x9x9x32xf32> to vector<2x1x8x8x32xf32>
    %13 = vector.shape_cast %12 : vector<2x1x8x8x32xf32> to vector<2x8x8x32xf32>
    %14 = arith.maximumf %11, %13 : vector<2x8x8x32xf32>
    %15 = vector.extract_strided_slice %0 {offsets = [0, 2, 0, 1, 0], sizes = [2, 1, 8, 8, 32], strides = [1, 1, 1, 1, 1]} : vector<2x4x9x9x32xf32> to vector<2x1x8x8x32xf32>
    %16 = vector.shape_cast %15 : vector<2x1x8x8x32xf32> to vector<2x8x8x32xf32>
    %17 = arith.maximumf %14, %16 : vector<2x8x8x32xf32>
    %18 = vector.extract_strided_slice %0 {offsets = [0, 0, 1, 0, 0], sizes = [2, 1, 8, 8, 32], strides = [1, 1, 1, 1, 1]} : vector<2x4x9x9x32xf32> to vector<2x1x8x8x32xf32>
    %19 = vector.shape_cast %18 : vector<2x1x8x8x32xf32> to vector<2x8x8x32xf32>
    %20 = arith.maximumf %17, %19 : vector<2x8x8x32xf32>
    %21 = vector.extract_strided_slice %0 {offsets = [0, 1, 1, 0, 0], sizes = [2, 1, 8, 8, 32], strides = [1, 1, 1, 1, 1]} : vector<2x4x9x9x32xf32> to vector<2x1x8x8x32xf32>
    %22 = vector.shape_cast %21 : vector<2x1x8x8x32xf32> to vector<2x8x8x32xf32>
    %23 = arith.maximumf %20, %22 : vector<2x8x8x32xf32>
    %24 = vector.extract_strided_slice %0 {offsets = [0, 0, 1, 1, 0], sizes = [2, 1, 8, 8, 32], strides = [1, 1, 1, 1, 1]} : vector<2x4x9x9x32xf32> to vector<2x1x8x8x32xf32>
    %25 = vector.shape_cast %24 : vector<2x1x8x8x32xf32> to vector<2x8x8x32xf32>
    %26 = arith.maximumf %23, %25 : vector<2x8x8x32xf32>
    %c0_4 = arith.constant 0 : index
    %c0_5 = arith.constant 0 : index
    %27 = vector.load %arg4[%c0_4, %c0_5] : memref<2x64xf32, #tpu.memory_space<vmem>>, vector<2x64xf32>
    %28 = vector.shape_cast %26 : vector<2x8x8x32xf32> to vector<128x32xf32>
    %c0_6 = arith.constant 0 : index
    %c0_7 = arith.constant 0 : index
    %29 = vector.load %arg3[%c0_6, %c0_7] : memref<32x64xf32, #tpu.memory_space<vmem>>, vector<32x64xf32>
    %cst = arith.constant dense<0.000000e+00> : vector<128x64xf32>
    %30 = tpu.matmul %28, %29, %cst {dimension_numbers = #tpu.dot_dimension_numbers<[1], [0], [0], [1], [0, 0, 1, 1], [], []>} : vector<128x32xf32>, vector<32x64xf32>, vector<128x64xf32> -> vector<128x64xf32>
    %31 = vector.extract_strided_slice %27 {offsets = [0, 0], sizes = [1, 64], strides = [1, 1]} : vector<2x64xf32> to vector<1x64xf32>
    %32 = vector.broadcast %31 : vector<1x64xf32> to vector<128x64xf32>
    %33 = arith.mulf %30, %32 : vector<128x64xf32>
    %34 = vector.extract_strided_slice %27 {offsets = [1, 0], sizes = [1, 64], strides = [1, 1]} : vector<2x64xf32> to vector<1x64xf32>
    %35 = vector.broadcast %34 : vector<1x64xf32> to vector<128x64xf32>
    %36 = arith.addf %33, %35 : vector<128x64xf32>
    %cst_8 = arith.constant 0.000000e+00 : f32
    %37 = vector.broadcast %cst_8 : f32 to vector<128x64xf32>
    %38 = arith.maximumf %36, %37 : vector<128x64xf32>
    %c0_9 = arith.constant 0 : index
    %c0_10 = arith.constant 0 : index
    %c0_11 = arith.constant 0 : index
    %c0_12 = arith.constant 0 : index
    %39 = vector.load %arg2[%c0_9, %c0_10, %c0_11, %c0_12] : memref<2x8x8x64xf32, #tpu.memory_space<vmem>>, vector<2x8x8x64xf32>
    %40 = vector.shape_cast %39 : vector<2x8x8x64xf32> to vector<128x64xf32>
    %41 = arith.addf %38, %40 : vector<128x64xf32>
    %42 = vector.shape_cast %41 : vector<128x64xf32> to vector<2x8x8x64xf32>
    %cst_13 = arith.constant 0.000000e+00 : f32
    %43 = vector.broadcast %cst_13 : f32 to vector<2x1x8x64xf32>
    %44 = tpu.concatenate %43, %42, %43 in 1 : vector<2x1x8x64xf32>, vector<2x8x8x64xf32>, vector<2x1x8x64xf32> -> vector<2x10x8x64xf32>
    %cst_14 = arith.constant 0.000000e+00 : f32
    %45 = vector.broadcast %cst_14 : f32 to vector<2x10x1x64xf32>
    %46 = tpu.concatenate %45, %44, %45 in 2 : vector<2x10x1x64xf32>, vector<2x10x8x64xf32>, vector<2x10x1x64xf32> -> vector<2x10x10x64xf32>
    %47 = vector.extract_strided_slice %46 {offsets = [0, 0, 0, 0], sizes = [2, 8, 8, 64], strides = [1, 1, 1, 1]} : vector<2x10x10x64xf32> to vector<2x8x8x64xf32>
    %48 = vector.shape_cast %47 : vector<2x8x8x64xf32> to vector<128x64xf32>
    %49 = vector.extract_strided_slice %46 {offsets = [0, 0, 1, 0], sizes = [2, 8, 8, 64], strides = [1, 1, 1, 1]} : vector<2x10x10x64xf32> to vector<2x8x8x64xf32>
    %50 = vector.shape_cast %49 : vector<2x8x8x64xf32> to vector<128x64xf32>
    %51 = vector.extract_strided_slice %46 {offsets = [0, 0, 2, 0], sizes = [2, 8, 8, 64], strides = [1, 1, 1, 1]} : vector<2x10x10x64xf32> to vector<2x8x8x64xf32>
    %52 = vector.shape_cast %51 : vector<2x8x8x64xf32> to vector<128x64xf32>
    %53 = vector.extract_strided_slice %46 {offsets = [0, 1, 0, 0], sizes = [2, 8, 8, 64], strides = [1, 1, 1, 1]} : vector<2x10x10x64xf32> to vector<2x8x8x64xf32>
    %54 = vector.shape_cast %53 : vector<2x8x8x64xf32> to vector<128x64xf32>
    %55 = vector.extract_strided_slice %46 {offsets = [0, 1, 1, 0], sizes = [2, 8, 8, 64], strides = [1, 1, 1, 1]} : vector<2x10x10x64xf32> to vector<2x8x8x64xf32>
    %56 = vector.shape_cast %55 : vector<2x8x8x64xf32> to vector<128x64xf32>
    %57 = vector.extract_strided_slice %46 {offsets = [0, 1, 2, 0], sizes = [2, 8, 8, 64], strides = [1, 1, 1, 1]} : vector<2x10x10x64xf32> to vector<2x8x8x64xf32>
    %58 = vector.shape_cast %57 : vector<2x8x8x64xf32> to vector<128x64xf32>
    %59 = vector.extract_strided_slice %46 {offsets = [0, 2, 0, 0], sizes = [2, 8, 8, 64], strides = [1, 1, 1, 1]} : vector<2x10x10x64xf32> to vector<2x8x8x64xf32>
    %60 = vector.shape_cast %59 : vector<2x8x8x64xf32> to vector<128x64xf32>
    %61 = vector.extract_strided_slice %46 {offsets = [0, 2, 1, 0], sizes = [2, 8, 8, 64], strides = [1, 1, 1, 1]} : vector<2x10x10x64xf32> to vector<2x8x8x64xf32>
    %62 = vector.shape_cast %61 : vector<2x8x8x64xf32> to vector<128x64xf32>
    %63 = vector.extract_strided_slice %46 {offsets = [0, 2, 2, 0], sizes = [2, 8, 8, 64], strides = [1, 1, 1, 1]} : vector<2x10x10x64xf32> to vector<2x8x8x64xf32>
    %64 = vector.shape_cast %63 : vector<2x8x8x64xf32> to vector<128x64xf32>
    %65 = tpu.concatenate %48, %50, %52, %54, %56, %58, %60, %62, %64 in 1 : vector<128x64xf32>, vector<128x64xf32>, vector<128x64xf32>, vector<128x64xf32>, vector<128x64xf32>, vector<128x64xf32>, vector<128x64xf32>, vector<128x64xf32>, vector<128x64xf32> -> vector<128x576xf32>
    %c0_15 = arith.constant 0 : index
    %c0_16 = arith.constant 0 : index
    %66 = vector.load %arg6[%c0_15, %c0_16] : memref<2x64xf32, #tpu.memory_space<vmem>>, vector<2x64xf32>
    %c0_17 = arith.constant 0 : index
    %c0_18 = arith.constant 0 : index
    %67 = vector.load %arg5[%c0_17, %c0_18] : memref<576x64xf32, #tpu.memory_space<vmem>>, vector<576x64xf32>
    %cst_19 = arith.constant dense<0.000000e+00> : vector<128x64xf32>
    %68 = tpu.matmul %65, %67, %cst_19 {dimension_numbers = #tpu.dot_dimension_numbers<[1], [0], [0], [1], [0, 0, 1, 1], [], []>} : vector<128x576xf32>, vector<576x64xf32>, vector<128x64xf32> -> vector<128x64xf32>
    %69 = vector.extract_strided_slice %66 {offsets = [0, 0], sizes = [1, 64], strides = [1, 1]} : vector<2x64xf32> to vector<1x64xf32>
    %70 = vector.broadcast %69 : vector<1x64xf32> to vector<128x64xf32>
    %71 = arith.mulf %68, %70 : vector<128x64xf32>
    %72 = vector.extract_strided_slice %66 {offsets = [1, 0], sizes = [1, 64], strides = [1, 1]} : vector<2x64xf32> to vector<1x64xf32>
    %73 = vector.broadcast %72 : vector<1x64xf32> to vector<128x64xf32>
    %74 = arith.addf %71, %73 : vector<128x64xf32>
    %cst_20 = arith.constant 0.000000e+00 : f32
    %75 = vector.broadcast %cst_20 : f32 to vector<128x64xf32>
    %76 = arith.maximumf %74, %75 : vector<128x64xf32>
    %77 = vector.shape_cast %76 : vector<128x64xf32> to vector<2x64x64xf32>
    %cst_21 = arith.constant dense<0.000000e+00> : vector<2x64xf32>
    %78 = vector.multi_reduction <add>, %77, %cst_21 [1] : vector<2x64x64xf32> to vector<2x64xf32>
    %cst_22 = arith.constant 0.000000e+00 : f32
    %79 = vector.broadcast %cst_22 : f32 to vector<2x1xf32>
    %80 = vector.extract_strided_slice %78 {offsets = [0, 0], sizes = [2, 63], strides = [1, 1]} : vector<2x64xf32> to vector<2x63xf32>
    %81 = tpu.concatenate %79, %80 in 1 : vector<2x1xf32>, vector<2x63xf32> -> vector<2x64xf32>
    %82 = vector.extract_strided_slice %78 {offsets = [0, 1], sizes = [2, 63], strides = [1, 1]} : vector<2x64xf32> to vector<2x63xf32>
    %83 = tpu.concatenate %82, %79 in 1 : vector<2x63xf32>, vector<2x1xf32> -> vector<2x64xf32>
    %c0_23 = arith.constant 0 : index
    %c0_24 = arith.constant 0 : index
    %84 = vector.load %arg7[%c0_23, %c0_24] : memref<3x64xf32, #tpu.memory_space<vmem>>, vector<3x64xf32>
    %85 = vector.extract_strided_slice %84 {offsets = [0, 0], sizes = [1, 64], strides = [1, 1]} : vector<3x64xf32> to vector<1x64xf32>
    %86 = vector.broadcast %85 : vector<1x64xf32> to vector<2x64xf32>
    %87 = arith.mulf %86, %81 : vector<2x64xf32>
    %88 = vector.extract_strided_slice %84 {offsets = [1, 0], sizes = [1, 64], strides = [1, 1]} : vector<3x64xf32> to vector<1x64xf32>
    %89 = vector.broadcast %88 : vector<1x64xf32> to vector<2x64xf32>
    %90 = arith.mulf %89, %78 : vector<2x64xf32>
    %91 = arith.addf %87, %90 : vector<2x64xf32>
    %92 = vector.extract_strided_slice %84 {offsets = [2, 0], sizes = [1, 64], strides = [1, 1]} : vector<3x64xf32> to vector<1x64xf32>
    %93 = vector.broadcast %92 : vector<1x64xf32> to vector<2x64xf32>
    %94 = arith.mulf %93, %83 : vector<2x64xf32>
    %95 = arith.addf %91, %94 : vector<2x64xf32>
    %cst_25 = arith.constant 0.000000e+00 : f32
    %96 = vector.broadcast %cst_25 : f32 to vector<2x64xf32>
    %97 = arith.subf %96, %95 : vector<2x64xf32>
    %98 = math.exp %97 : vector<2x64xf32>
    %cst_26 = arith.constant 1.000000e+00 : f32
    %99 = vector.broadcast %cst_26 : f32 to vector<2x64xf32>
    %100 = arith.addf %99, %98 : vector<2x64xf32>
    %cst_27 = arith.constant 1.000000e+00 : f32
    %101 = vector.broadcast %cst_27 : f32 to vector<2x64xf32>
    %102 = arith.divf %101, %100 : vector<2x64xf32>
    %103 = vector.shape_cast %102 : vector<2x64xf32> to vector<2x1x64xf32>
    %104 = vector.broadcast %103 : vector<2x1x64xf32> to vector<2x64x64xf32>
    %105 = arith.mulf %77, %104 : vector<2x64x64xf32>
    %106 = vector.shape_cast %105 : vector<2x64x64xf32> to vector<2x8x8x64xf32>
    %c0_28 = arith.constant 0 : index
    %c0_29 = arith.constant 0 : index
    %c0_30 = arith.constant 0 : index
    %c0_31 = arith.constant 0 : index
    %107 = vector.load %arg8[%c0_28, %c0_29, %c0_30, %c0_31] : memref<2x8x8x64xf32, #tpu.memory_space<vmem>>, vector<2x8x8x64xf32>
    tpu.vector_store %arg8[%c0_28, %c0_29, %c0_30, %c0_31], %106 {strides = array<i32>} : memref<2x8x8x64xf32, #tpu.memory_space<vmem>>, vector<2x8x8x64xf32>,
    return
  }
  func.func @transform_0(%arg0: i32) -> (i32, i32, i32, i32, i32) {
    %c0_i32 = arith.constant 0 : i32
    %c0_i32_0 = arith.constant 0 : i32
    %c0_i32_1 = arith.constant 0 : i32
    %c0_i32_2 = arith.constant 0 : i32
    %c0_i32_3 = arith.constant 0 : i32
    return %arg0, %c0_i32, %c0_i32_0, %c0_i32_1, %c0_i32_2 : i32, i32, i32, i32, i32
  }
  func.func @transform_1(%arg0: i32) -> (i32, i32, i32, i32) {
    %c0_i32 = arith.constant 0 : i32
    %c0_i32_0 = arith.constant 0 : i32
    %c0_i32_1 = arith.constant 0 : i32
    %c0_i32_2 = arith.constant 0 : i32
    return %arg0, %c0_i32, %c0_i32_0, %c0_i32_1 : i32, i32, i32, i32
  }
  func.func @transform_2(%arg0: i32) -> (i32, i32) {
    %c0_i32 = arith.constant 0 : i32
    %c0_i32_0 = arith.constant 0 : i32
    %c0_i32_1 = arith.constant 0 : i32
    return %c0_i32, %c0_i32_0 : i32, i32
  }
  func.func @transform_3(%arg0: i32) -> (i32, i32) {
    %c0_i32 = arith.constant 0 : i32
    %c0_i32_0 = arith.constant 0 : i32
    %c0_i32_1 = arith.constant 0 : i32
    return %c0_i32, %c0_i32_0 : i32, i32
  }
  func.func @transform_4(%arg0: i32) -> (i32, i32) {
    %c0_i32 = arith.constant 0 : i32
    %c0_i32_0 = arith.constant 0 : i32
    %c0_i32_1 = arith.constant 0 : i32
    return %c0_i32, %c0_i32_0 : i32, i32
  }
  func.func @transform_5(%arg0: i32) -> (i32, i32) {
    %c0_i32 = arith.constant 0 : i32
    %c0_i32_0 = arith.constant 0 : i32
    %c0_i32_1 = arith.constant 0 : i32
    return %c0_i32, %c0_i32_0 : i32, i32
  }
  func.func @transform_6(%arg0: i32) -> (i32, i32) {
    %c0_i32 = arith.constant 0 : i32
    %c0_i32_0 = arith.constant 0 : i32
    %c0_i32_1 = arith.constant 0 : i32
    return %c0_i32, %c0_i32_0 : i32, i32
  }
  func.func @transform_7(%arg0: i32) -> (i32, i32, i32, i32) {
    %c0_i32 = arith.constant 0 : i32
    %c0_i32_0 = arith.constant 0 : i32
    %c0_i32_1 = arith.constant 0 : i32
    %c0_i32_2 = arith.constant 0 : i32
    return %arg0, %c0_i32, %c0_i32_0, %c0_i32_1 : i32, i32, i32, i32
  }
}

</mosaic_0001>

<llo_original>
// kernel: tpu_custom_call.1
$region0: #{tpu_custom_call.1}
  #allocation0 [shape = 'u32[]', space=smem, size = 0x4, offset = 0x4, fixed_abs, tag = 'smem constant byte address 0x4 - core index']
  #allocation1 [shape = 'u32[144,128]{1,0:T(1,128)}', space=vmem, size = 0x12000, scoped, tag = 'internal scratch']
  %s0 = inlined_call_operand.vmem [shape: f32[2,4,9,9,32], index: 0, kind: input, shape index: {}]
  %s1 = inlined_call_operand.vmem [shape: f32[2,8,8,64], index: 1, kind: input, shape index: {}]
  %s2 = inlined_call_operand.vmem [shape: f32[32,64], index: 2, kind: input, shape index: {}]
  %s3 = inlined_call_operand.vmem [shape: f32[2,64], index: 3, kind: input, shape index: {}]
  %s4 = inlined_call_operand.vmem [shape: f32[576,64], index: 4, kind: input, shape index: {}]
  %s5 = inlined_call_operand.vmem [shape: f32[2,64], index: 5, kind: input, shape index: {}]
  %s6 = inlined_call_operand.vmem [shape: f32[3,64], index: 6, kind: input, shape index: {}]
  %s7 = inlined_call_operand.hbm [shape: f32[2,8,8,64], index: 7, kind: output, shape index: {}]
  %s8 = sld [smem:[#allocation0]]
  $region38: #{tpu_custom_call.1} parent=0
    _
  %s10 = ssub.s32 1, %s8
  %s11 = scalar_select 0, %s10, %s8
  $region1: #{tpu_custom_call.1} parent=0
    #allocation2 [shape = 'u8[65536]{0}', space=vmem, size = 0x10000, scoped, tag = 'output window, operand 0, single buffered']
    #allocation3 [shape = 's32[1]{0}', space=sflag, size = 0x4, scoped, tag = 'scoped memory for tpu_custom_call.1']
    %12 = vsyncpa [#allocation3], 0
    // Predicated region
    $region2: #{tpu_custom_call.1} parent=1 // pred_check
      _
    $region3: #{tpu_custom_call.1} parent=1 // pred_check_branch
      %14 = sbr.rel (0) target = $region5
    $region4: #{tpu_custom_call.1} parent=1 // pred_region
      _
    $region5: #{tpu_custom_call.1} parent=1 // pred_fallthru
      _
    // Predicated region
    $region6: #{tpu_custom_call.1} parent=1 // pred_check
      _
    $region7: #{tpu_custom_call.1} parent=1 // pred_check_branch
      %16 = sbr.rel (0) target = $region9
    $region8: #{tpu_custom_call.1} parent=1 // pred_region
      _
    $region9: #{tpu_custom_call.1} parent=1 // pred_fallthru
      _
    // Predicated region
    $region10: #{tpu_custom_call.1} parent=1 // pred_check
      _
    $region11: #{tpu_custom_call.1} parent=1 // pred_check_branch
      %18 = sbr.rel (0) target = $region13
    $region12: #{tpu_custom_call.1} parent=1 // pred_region
      _
    $region13: #{tpu_custom_call.1} parent=1 // pred_fallthru
      _
    // Predicated region
    $region14: #{tpu_custom_call.1} parent=1 // pred_check
      _
    $region15: #{tpu_custom_call.1} parent=1 // pred_check_branch
      %20 = sbr.rel (0) target = $region17
    $region16: #{tpu_custom_call.1} parent=1 // pred_region
      _
    $region17: #{tpu_custom_call.1} parent=1 // pred_fallthru
      _
    // Predicated region
    $region18: #{tpu_custom_call.1} parent=1 // pred_check
      _
    $region19: #{tpu_custom_call.1} parent=1 // pred_check_branch
      %22 = sbr.rel (0) target = $region21
    $region20: #{tpu_custom_call.1} parent=1 // pred_region
      _
    $region21: #{tpu_custom_call.1} parent=1 // pred_fallthru
      _
    // Predicated region
    $region22: #{tpu_custom_call.1} parent=1 // pred_check
      _
    $region23: #{tpu_custom_call.1} parent=1 // pred_check_branch
      %24 = sbr.rel (0) target = $region25
    $region24: #{tpu_custom_call.1} parent=1 // pred_region
      _
    $region25: #{tpu_custom_call.1} parent=1 // pred_fallthru
      _
    // Predicated region
    $region26: #{tpu_custom_call.1} parent=1 // pred_check
      _
    $region27: #{tpu_custom_call.1} parent=1 // pred_check_branch
      %26 = sbr.rel (0) target = $region29
    $region28: #{tpu_custom_call.1} parent=1 // pred_region
      _
    $region29: #{tpu_custom_call.1} parent=1 // pred_fallthru
      _
    %v27 = vld [vmem:[%s0] sm:$0xff]
    %v28 = vld [vmem:[%s0 + $0x8] sm:$0x1]
    %v29 = vld [vmem:[%s0 + $0x10] sm:$0xff]
    %v30 = vld [vmem:[%s0 + $0x18] sm:$0x1]
    %v31 = vld [vmem:[%s0 + $0x20] sm:$0xff]
    %v32 = vld [vmem:[%s0 + $0x28] sm:$0x1]
    %v33 = vld [vmem:[%s0 + $0x30] sm:$0xff]
    %v34 = vld [vmem:[%s0 + $0x38] sm:$0x1]
    %v35 = vld [vmem:[%s0 + $0x40] sm:$0xff]
    %v36 = vld [vmem:[%s0 + $0x48] sm:$0x1]
    %v37 = vld [vmem:[%s0 + $0x50] sm:$0xff]
    %v38 = vld [vmem:[%s0 + $0x58] sm:$0x1]
    %v39 = vld [vmem:[%s0 + $0x60] sm:$0xff]
    %v40 = vld [vmem:[%s0 + $0x68] sm:$0x1]
    %v41 = vld [vmem:[%s0 + $0x70] sm:$0xff]
    %v42 = vld [vmem:[%s0 + $0x78] sm:$0x1]
    %v43 = vld [vmem:[%s0 + $0x80] sm:$0xff]
    %v44 = vld [vmem:[%s0 + $0x88] sm:$0x1]
    %v45 = vld [vmem:[%s0 + $0x90] sm:$0xff]
    %v46 = vld [vmem:[%s0 + $0xa0] sm:$0xff]
    %v47 = vld [vmem:[%s0 + $0xb0] sm:$0xff]
    %v48 = vld [vmem:[%s0 + $0xc0] sm:$0xff]
    %v49 = vld [vmem:[%s0 + $0xd0] sm:$0xff]
    %v50 = vld [vmem:[%s0 + $0xe0] sm:$0xff]
    %v51 = vld [vmem:[%s0 + $0xf0] sm:$0xff]
    %v52 = vld [vmem:[%s0 + $0x100] sm:$0xff]
    %v53 = vld [vmem:[%s0 + $0x110] sm:$0xff]
    %v54 = vld [vmem:[%s0 + $0x120] sm:$0xff]
    %v55 = vld [vmem:[%s0 + $0x128] sm:$0x1]
    %v56 = vld [vmem:[%s0 + $0x130] sm:$0xff]
    %v57 = vld [vmem:[%s0 + $0x138] sm:$0x1]
    %v58 = vld [vmem:[%s0 + $0x140] sm:$0xff]
    %v59 = vld [vmem:[%s0 + $0x148] sm:$0x1]
    %v60 = vld [vmem:[%s0 + $0x150] sm:$0xff]
    %v61 = vld [vmem:[%s0 + $0x158] sm:$0x1]
    %v62 = vld [vmem:[%s0 + $0x160] sm:$0xff]
    %v63 = vld [vmem:[%s0 + $0x168] sm:$0x1]
    %v64 = vld [vmem:[%s0 + $0x170] sm:$0xff]
    %v65 = vld [vmem:[%s0 + $0x178] sm:$0x1]
    %v66 = vld [vmem:[%s0 + $0x180] sm:$0xff]
    %v67 = vld [vmem:[%s0 + $0x188] sm:$0x1]
    %v68 = vld [vmem:[%s0 + $0x190] sm:$0xff]
    %v69 = vld [vmem:[%s0 + $0x198] sm:$0x1]
    %v70 = vld [vmem:[%s0 + $0x1b0] sm:$0xff]
    %v71 = vld [vmem:[%s0 + $0x1c0] sm:$0xff]
    %v72 = vld [vmem:[%s0 + $0x1d0] sm:$0xff]
    %v73 = vld [vmem:[%s0 + $0x1e0] sm:$0xff]
    %v74 = vld [vmem:[%s0 + $0x1f0] sm:$0xff]
    %v75 = vld [vmem:[%s0 + $0x200] sm:$0xff]
    %v76 = vld [vmem:[%s0 + $0x210] sm:$0xff]
    %v77 = vld [vmem:[%s0 + $0x220] sm:$0xff]
    %v78 = vld [vmem:[%s0 + $0x240] sm:$0xff]
    %v79 = vld [vmem:[%s0 + $0x248] sm:$0x1]
    %v80 = vld [vmem:[%s0 + $0x250] sm:$0xff]
    %v81 = vld [vmem:[%s0 + $0x258] sm:$0x1]
    %v82 = vld [vmem:[%s0 + $0x260] sm:$0xff]
    %v83 = vld [vmem:[%s0 + $0x268] sm:$0x1]
    %v84 = vld [vmem:[%s0 + $0x270] sm:$0xff]
    %v85 = vld [vmem:[%s0 + $0x278] sm:$0x1]
    %v86 = vld [vmem:[%s0 + $0x280] sm:$0xff]
    %v87 = vld [vmem:[%s0 + $0x288] sm:$0x1]
    %v88 = vld [vmem:[%s0 + $0x290] sm:$0xff]
    %v89 = vld [vmem:[%s0 + $0x298] sm:$0x1]
    %v90 = vld [vmem:[%s0 + $0x2a0] sm:$0xff]
    %v91 = vld [vmem:[%s0 + $0x2a8] sm:$0x1]
    %v92 = vld [vmem:[%s0 + $0x2b0] sm:$0xff]
    %v93 = vld [vmem:[%s0 + $0x2b8] sm:$0x1]
    %v94 = vld [vmem:[%s0 + $0x2c0] sm:$0xff]
    %v95 = vld [vmem:[%s0 + $0x2c8] sm:$0x1]
    %v96 = vld [vmem:[%s0 + $0x2d0] sm:$0xff]
    %v97 = vld [vmem:[%s0 + $0x2e0] sm:$0xff]
    %v98 = vld [vmem:[%s0 + $0x2f0] sm:$0xff]
    %v99 = vld [vmem:[%s0 + $0x300] sm:$0xff]
    %v100 = vld [vmem:[%s0 + $0x310] sm:$0xff]
    %v101 = vld [vmem:[%s0 + $0x320] sm:$0xff]
    %v102 = vld [vmem:[%s0 + $0x330] sm:$0xff]
    %v103 = vld [vmem:[%s0 + $0x340] sm:$0xff]
    %v104 = vld [vmem:[%s0 + $0x350] sm:$0xff]
    %v105 = vld [vmem:[%s0 + $0x360] sm:$0xff]
    %v106 = vld [vmem:[%s0 + $0x368] sm:$0x1]
    %v107 = vld [vmem:[%s0 + $0x370] sm:$0xff]
    %v108 = vld [vmem:[%s0 + $0x378] sm:$0x1]
    %v109 = vld [vmem:[%s0 + $0x380] sm:$0xff]
    %v110 = vld [vmem:[%s0 + $0x388] sm:$0x1]
    %v111 = vld [vmem:[%s0 + $0x390] sm:$0xff]
    %v112 = vld [vmem:[%s0 + $0x398] sm:$0x1]
    %v113 = vld [vmem:[%s0 + $0x3a0] sm:$0xff]
    %v114 = vld [vmem:[%s0 + $0x3a8] sm:$0x1]
    %v115 = vld [vmem:[%s0 + $0x3b0] sm:$0xff]
    %v116 = vld [vmem:[%s0 + $0x3b8] sm:$0x1]
    %v117 = vld [vmem:[%s0 + $0x3c0] sm:$0xff]
    %v118 = vld [vmem:[%s0 + $0x3c8] sm:$0x1]
    %v119 = vld [vmem:[%s0 + $0x3d0] sm:$0xff]
    %v120 = vld [vmem:[%s0 + $0x3d8] sm:$0x1]
    %v121 = vld [vmem:[%s0 + $0x3f0] sm:$0xff]
    %v122 = vld [vmem:[%s0 + $0x400] sm:$0xff]
    %v123 = vld [vmem:[%s0 + $0x410] sm:$0xff]
    %v124 = vld [vmem:[%s0 + $0x420] sm:$0xff]
    %v125 = vld [vmem:[%s0 + $0x430] sm:$0xff]
    %v126 = vld [vmem:[%s0 + $0x440] sm:$0xff]
    %v127 = vld [vmem:[%s0 + $0x450] sm:$0xff]
    %v128 = vld [vmem:[%s0 + $0x460] sm:$0xff]
    %v129 = vmax.f32 %v27, %v45
    %v130 = vmax.f32 %v29, %v46
    %v131 = vmax.f32 %v31, %v47
    %v132 = vmax.f32 %v33, %v48
    %v133 = vmax.f32 %v35, %v49
    %v134 = vmax.f32 %v37, %v50
    %v135 = vmax.f32 %v39, %v51
    %v136 = vmax.f32 %v41, %v52
    %v137 = vmax.f32 %v78, %v96
    %v138 = vmax.f32 %v80, %v97
    %v139 = vmax.f32 %v82, %v98
    %v140 = vmax.f32 %v84, %v99
    %v141 = vmax.f32 %v86, %v100
    %v142 = vmax.f32 %v88, %v101
    %v143 = vmax.f32 %v90, %v102
    %v144 = vmax.f32 %v92, %v103
    %vm177 = vcmask 1046528
    %v178 = vrot.slane %v27, 1
    %v179 = vrot.slane %v28, 1
    %v180 = vsel %vm177, %v178, %v179
    %v181 = vrot.slane %v29, 1
    %v182 = vrot.slane %v30, 1
    %v183 = vsel %vm177, %v181, %v182
    %v184 = vrot.slane %v31, 1
    %v185 = vrot.slane %v32, 1
    %v186 = vsel %vm177, %v184, %v185
    %v187 = vrot.slane %v33, 1
    %v188 = vrot.slane %v34, 1
    %v189 = vsel %vm177, %v187, %v188
    %v190 = vrot.slane %v35, 1
    %v191 = vrot.slane %v36, 1
    %v192 = vsel %vm177, %v190, %v191
    %v193 = vrot.slane %v37, 1
    %v194 = vrot.slane %v38, 1
    %v195 = vsel %vm177, %v193, %v194
    %v196 = vrot.slane %v39, 1
    %v197 = vrot.slane %v40, 1
    %v198 = vsel %vm177, %v196, %v197
    %v199 = vrot.slane %v41, 1
    %v200 = vrot.slane %v42, 1
    %v201 = vsel %vm177, %v199, %v200
    %v202 = vrot.slane %v78, 1
    %v203 = vrot.slane %v79, 1
    %v204 = vsel %vm177, %v202, %v203
    %v205 = vrot.slane %v80, 1
    %v206 = vrot.slane %v81, 1
    %v207 = vsel %vm177, %v205, %v206
    %v208 = vrot.slane %v82, 1
    %v209 = vrot.slane %v83, 1
    %v210 = vsel %vm177, %v208, %v209
    %v211 = vrot.slane %v84, 1
    %v212 = vrot.slane %v85, 1
    %v213 = vsel %vm177, %v211, %v212
    %v214 = vrot.slane %v86, 1
    %v215 = vrot.slane %v87, 1
    %v216 = vsel %vm177, %v214, %v215
    %v217 = vrot.slane %v88, 1
    %v218 = vrot.slane %v89, 1
    %v219 = vsel %vm177, %v217, %v218
    %v220 = vrot.slane %v90, 1
    %v221 = vrot.slane %v91, 1
    %v222 = vsel %vm177, %v220, %v221
    %v223 = vrot.slane %v92, 1
    %v224 = vrot.slane %v93, 1
    %v225 = vsel %vm177, %v223, %v224
    %v242 = vmax.f32 %v129, %v180
    %v243 = vmax.f32 %v130, %v183
    %v244 = vmax.f32 %v131, %v186
    %v245 = vmax.f32 %v132, %v189
    %v246 = vmax.f32 %v133, %v192
    %v247 = vmax.f32 %v134, %v195
    %v248 = vmax.f32 %v135, %v198
    %v249 = vmax.f32 %v136, %v201
    %v250 = vmax.f32 %v137, %v204
    %v251 = vmax.f32 %v138, %v207
    %v252 = vmax.f32 %v139, %v210
    %v253 = vmax.f32 %v140, %v213
    %v254 = vmax.f32 %v141, %v216
    %v255 = vmax.f32 %v142, %v219
    %v256 = vmax.f32 %v143, %v222
    %v257 = vmax.f32 %v144, %v225
    %v258 = vmax.f32 %v242, %v54
    %v259 = vmax.f32 %v243, %v56
    %v260 = vmax.f32 %v244, %v58
    %v261 = vmax.f32 %v245, %v60
    %v262 = vmax.f32 %v246, %v62
    %v263 = vmax.f32 %v247, %v64
    %v264 = vmax.f32 %v248, %v66
    %v265 = vmax.f32 %v249, %v68
    %v266 = vmax.f32 %v250, %v105
    %v267 = vmax.f32 %v251, %v107
    %v268 = vmax.f32 %v252, %v109
    %v269 = vmax.f32 %v253, %v111
    %v270 = vmax.f32 %v254, %v113
    %v271 = vmax.f32 %v255, %v115
    %v272 = vmax.f32 %v256, %v117
    %v273 = vmax.f32 %v257, %v119
    %v274 = vmax.f32 %v258, %v70
    %v275 = vmax.f32 %v259, %v71
    %v276 = vmax.f32 %v260, %v72
    %v277 = vmax.f32 %v261, %v73
    %v278 = vmax.f32 %v262, %v74
    %v279 = vmax.f32 %v263, %v75
    %v280 = vmax.f32 %v264, %v76
    %v281 = vmax.f32 %v265, %v77
    %v282 = vmax.f32 %v266, %v121
    %v283 = vmax.f32 %v267, %v122
    %v284 = vmax.f32 %v268, %v123
    %v285 = vmax.f32 %v269, %v124
    %v286 = vmax.f32 %v270, %v125
    %v287 = vmax.f32 %v271, %v126
    %v288 = vmax.f32 %v272, %v127
    %v289 = vmax.f32 %v273, %v128
    %v322 = vrot.slane %v54, 1
    %v323 = vrot.slane %v55, 1
    %v324 = vsel %vm177, %v322, %v323
    %v325 = vrot.slane %v56, 1
    %v326 = vrot.slane %v57, 1
    %v327 = vsel %vm177, %v325, %v326
    %v328 = vrot.slane %v58, 1
    %v329 = vrot.slane %v59, 1
    %v330 = vsel %vm177, %v328, %v329
    %v331 = vrot.slane %v60, 1
    %v332 = vrot.slane %v61, 1
    %v333 = vsel %vm177, %v331, %v332
    %v334 = vrot.slane %v62, 1
    %v335 = vrot.slane %v63, 1
    %v336 = vsel %vm177, %v334, %v335
    %v337 = vrot.slane %v64, 1
    %v338 = vrot.slane %v65, 1
    %v339 = vsel %vm177, %v337, %v338
    %v340 = vrot.slane %v66, 1
    %v341 = vrot.slane %v67, 1
    %v342 = vsel %vm177, %v340, %v341
    %v343 = vrot.slane %v68, 1
    %v344 = vrot.slane %v69, 1
    %v345 = vsel %vm177, %v343, %v344
    %v346 = vrot.slane %v105, 1
    %v347 = vrot.slane %v106, 1
    %v348 = vsel %vm177, %v346, %v347
    %v349 = vrot.slane %v107, 1
    %v350 = vrot.slane %v108, 1
    %v351 = vsel %vm177, %v349, %v350
    %v352 = vrot.slane %v109, 1
    %v353 = vrot.slane %v110, 1
    %v354 = vsel %vm177, %v352, %v353
    %v355 = vrot.slane %v111, 1
    %v356 = vrot.slane %v112, 1
    %v357 = vsel %vm177, %v355, %v356
    %v358 = vrot.slane %v113, 1
    %v359 = vrot.slane %v114, 1
    %v360 = vsel %vm177, %v358, %v359
    %v361 = vrot.slane %v115, 1
    %v362 = vrot.slane %v116, 1
    %v363 = vsel %vm177, %v361, %v362
    %v364 = vrot.slane %v117, 1
    %v365 = vrot.slane %v118, 1
    %v366 = vsel %vm177, %v364, %v365
    %v367 = vrot.slane %v119, 1
    %v368 = vrot.slane %v120, 1
    %v369 = vsel %vm177, %v367, %v368
    %v386 = vmax.f32 %v274, %v324
    %v387 = vmax.f32 %v275, %v327
    %v388 = vmax.f32 %v276, %v330
    %v389 = vmax.f32 %v277, %v333
    %v390 = vmax.f32 %v278, %v336
    %v391 = vmax.f32 %v279, %v339
    %v392 = vmax.f32 %v280, %v342
    %v393 = vmax.f32 %v281, %v345
    %v394 = vmax.f32 %v282, %v348
    %v395 = vmax.f32 %v283, %v351
    %v396 = vmax.f32 %v284, %v354
    %v397 = vmax.f32 %v285, %v357
    %v398 = vmax.f32 %v286, %v360
    %v399 = vmax.f32 %v287, %v363
    %v400 = vmax.f32 %v288, %v366
    %v401 = vmax.f32 %v289, %v369
    %v402 = vmax.f32 %v386, %v29
    %v403 = vmax.f32 %v387, %v31
    %v404 = vmax.f32 %v388, %v33
    %v405 = vmax.f32 %v389, %v35
    %v406 = vmax.f32 %v390, %v37
    %v407 = vmax.f32 %v391, %v39
    %v408 = vmax.f32 %v392, %v41
    %v409 = vmax.f32 %v393, %v43
    %v410 = vmax.f32 %v394, %v80
    %v411 = vmax.f32 %v395, %v82
    %v412 = vmax.f32 %v396, %v84
    %v413 = vmax.f32 %v397, %v86
    %v414 = vmax.f32 %v398, %v88
    %v415 = vmax.f32 %v399, %v90
    %v416 = vmax.f32 %v400, %v92
    %v417 = vmax.f32 %v401, %v94
    %v418 = vmax.f32 %v402, %v46
    %v419 = vmax.f32 %v403, %v47
    %v420 = vmax.f32 %v404, %v48
    %v421 = vmax.f32 %v405, %v49
    %v422 = vmax.f32 %v406, %v50
    %v423 = vmax.f32 %v407, %v51
    %v424 = vmax.f32 %v408, %v52
    %v425 = vmax.f32 %v409, %v53
    %v426 = vmax.f32 %v410, %v97
    %v427 = vmax.f32 %v411, %v98
    %v428 = vmax.f32 %v412, %v99
    %v429 = vmax.f32 %v413, %v100
    %v430 = vmax.f32 %v414, %v101
    %v431 = vmax.f32 %v415, %v102
    %v432 = vmax.f32 %v416, %v103
    %v433 = vmax.f32 %v417, %v104
    %v438 = vrot.slane %v43, 1
    %v439 = vrot.slane %v44, 1
    %v440 = vsel %vm177, %v438, %v439
    %v441 = vrot.slane %v94, 1
    %v442 = vrot.slane %v95, 1
    %v443 = vsel %vm177, %v441, %v442
    %v446 = vmax.f32 %v418, %v183
    %v447 = vmax.f32 %v419, %v186
    %v448 = vmax.f32 %v420, %v189
    %v449 = vmax.f32 %v421, %v192
    %v450 = vmax.f32 %v422, %v195
    %v451 = vmax.f32 %v423, %v198
    %v452 = vmax.f32 %v424, %v201
    %v453 = vmax.f32 %v425, %v440
    %v454 = vmax.f32 %v426, %v207
    %v455 = vmax.f32 %v427, %v210
    %v456 = vmax.f32 %v428, %v213
    %v457 = vmax.f32 %v429, %v216
    %v458 = vmax.f32 %v430, %v219
    %v459 = vmax.f32 %v431, %v222
    %v460 = vmax.f32 %v432, %v225
    %v461 = vmax.f32 %v433, %v443
    %v462 = vld [vmem:[%s3] sm:$0x3]
    %v463 = vld [vmem:[%s2] sm:$0xff]
    %v464 = vld [vmem:[%s2 + $0x8] sm:$0xff]
    %v465 = vld [vmem:[%s2 + $0x10] sm:$0xff]
    %v466 = vld [vmem:[%s2 + $0x18] sm:$0xff]
    %vm467 = vcmask 261120
    %v469 = vsel %vm467, %v446, 0
    %v472 = vsel %vm467, %v447, 0
    %v475 = vsel %vm467, %v448, 0
    %v478 = vsel %vm467, %v449, 0
    %v481 = vsel %vm467, %v450, 0
    %v484 = vsel %vm467, %v451, 0
    %v487 = vsel %vm467, %v452, 0
    %v490 = vsel %vm467, %v453, 0
    %v493 = vsel %vm467, %v454, 0
    %v496 = vsel %vm467, %v455, 0
    %v499 = vsel %vm467, %v456, 0
    %v502 = vsel %vm467, %v457, 0
    %v505 = vsel %vm467, %v458, 0
    %v508 = vsel %vm467, %v459, 0
    %v511 = vsel %vm467, %v460, 0
    %v514 = vsel %vm467, %v461, 0
    %516 = vmatprep.subr.mxu0 0.0
    %517 = vmatpush1.msra.mxu0 %v463
    %518 = vmatprep.subr.mxu0 0.0
    %519 = vmatpush1.msra.mxu0 %v464
    %520 = vmatprep.subr.mxu0 0.0
    %521 = vmatpush1.msra.mxu0 %v465
    %522 = vmatprep.subr.mxu0 0.0
    %523 = vmatpush1.msra.mxu0 %v466
    %524 = vmatprep.subr.mxu0 0.0
    %525 = vmatpush1.msra.mxu0 0.0
    %526 = vmatprep.subr.mxu0 0.0
    %527 = vmatpush1.msra.mxu0 0.0
    %528 = vmatprep.subr.mxu0 0.0
    %529 = vmatpush1.msra.mxu0 0.0
    %530 = vmatprep.subr.mxu0 0.0
    %531 = vmatpush1.msra.mxu0 0.0
    %532 = vmatprep.subr.mxu0 0.0
    %533 = vmatpush1.msra.mxu0 0.0
    %534 = vmatprep.subr.mxu0 0.0
    %535 = vmatpush1.msra.mxu0 0.0
    %536 = vmatprep.subr.mxu0 0.0
    %537 = vmatpush1.msra.mxu0 0.0
    %538 = vmatprep.subr.mxu0 0.0
    %539 = vmatpush1.msra.mxu0 0.0
    %540 = vmatprep.subr.mxu0 0.0
    %541 = vmatpush1.msra.mxu0 0.0
    %542 = vmatprep.subr.mxu0 0.0
    %543 = vmatpush1.msra.mxu0 0.0
    %544 = vmatprep.subr.mxu0 0.0
    %545 = vmatpush1.msra.mxu0 0.0
    %546 = vmatprep.subr.mxu0 0.0
    %547 = vmatpush1.msra.mxu0 0.0
    %548 = vmatprep.subr.mxu0 0.0
    %549 = vmatpush1.msra.mxu0 0.0
    %550 = vmatprep.subr.mxu0 0.0
    %551 = vmatpush1.msra.mxu0 0.0
    %552 = vmatprep.subr.mxu0 0.0
    %553 = vmatpush1.msra.mxu0 0.0
    %554 = vmatprep.subr.mxu0 0.0
    %555 = vmatpush1.msra.mxu0 0.0
    %556 = vmatprep.subr.mxu0 0.0
    %557 = vmatpush1.msra.mxu0 0.0
    %558 = vmatprep.subr.mxu0 0.0
    %559 = vmatpush1.msra.mxu0 0.0
    %560 = vmatprep.subr.mxu0 0.0
    %561 = vmatpush1.msra.mxu0 0.0
    %562 = vmatprep.subr.mxu0 0.0
    %563 = vmatpush1.msra.mxu0 0.0
    %564 = vmatprep.subr.mxu0 0.0
    %565 = vmatpush1.msra.mxu0 0.0
    %566 = vmatprep.subr.mxu0 0.0
    %567 = vmatpush1.msra.mxu0 0.0
    %568 = vmatprep.subr.mxu0 0.0
    %569 = vmatpush1.msra.mxu0 0.0
    %570 = vmatprep.subr.mxu0 0.0
    %571 = vmatpush1.msra.mxu0 0.0
    %572 = vmatprep.subr.mxu0 0.0
    %573 = vmatpush1.msra.mxu0 0.0
    %574 = vmatprep.subr.mxu0 0.0
    %575 = vmatpush1.msra.mxu0 0.0
    %576 = vmatprep.subr.mxu0 0.0
    %577 = vmatpush1.msra.mxu0 0.0
    %578 = vmatprep.subr.mxu0 0.0
    %579 = vmatpush1.msra.mxu0 0.0
    %580 = vmatprep.mubr.f32.mxu0 0.0
    %581 = vmatmul.mubr.f32.gmra.mrb[0].mxu0 %v469
    %v582 = vpop.f32.mrb[0].mxu0
    %v583 = vadd.f32 0.0, %v582
    %v584 = vpop.f32.mrb[0].mxu0
    %585 = vmatprep.mubr.f32.mxu0 0.0
    %586 = vmatmul.mubr.f32.gmra.mrb[0].mxu0 %v472
    %v587 = vpop.f32.mrb[0].mxu0
    %v588 = vadd.f32 0.0, %v587
    %v589 = vpop.f32.mrb[0].mxu0
    %590 = vmatprep.mubr.f32.mxu0 0.0
    %591 = vmatmul.mubr.f32.gmra.mrb[0].mxu0 %v475
    %v592 = vpop.f32.mrb[0].mxu0
    %v593 = vadd.f32 0.0, %v592
    %v594 = vpop.f32.mrb[0].mxu0
    %595 = vmatprep.mubr.f32.mxu0 0.0
    %596 = vmatmul.mubr.f32.gmra.mrb[0].mxu0 %v478
    %v597 = vpop.f32.mrb[0].mxu0
    %v598 = vadd.f32 0.0, %v597
    %v599 = vpop.f32.mrb[0].mxu0
    %600 = vmatprep.mubr.f32.mxu0 0.0
    %601 = vmatmul.mubr.f32.gmra.mrb[0].mxu0 %v481
    %v602 = vpop.f32.mrb[0].mxu0
    %v603 = vadd.f32 0.0, %v602
    %v604 = vpop.f32.mrb[0].mxu0
    %605 = vmatprep.mubr.f32.mxu0 0.0
    %606 = vmatmul.mubr.f32.gmra.mrb[0].mxu0 %v484
    %v607 = vpop.f32.mrb[0].mxu0
    %v608 = vadd.f32 0.0, %v607
    %v609 = vpop.f32.mrb[0].mxu0
    %610 = vmatprep.mubr.f32.mxu0 0.0
    %611 = vmatmul.mubr.f32.gmra.mrb[0].mxu0 %v487
    %v612 = vpop.f32.mrb[0].mxu0
    %v613 = vadd.f32 0.0, %v612
    %v614 = vpop.f32.mrb[0].mxu0
    %615 = vmatprep.mubr.f32.mxu0 0.0
    %616 = vmatmul.mubr.f32.gmra.mrb[0].mxu0 %v490
    %v617 = vpop.f32.mrb[0].mxu0
    %v618 = vadd.f32 0.0, %v617
    %v619 = vpop.f32.mrb[0].mxu0
    %620 = vmatprep.mubr.f32.mxu0 0.0
    %621 = vmatmul.mubr.f32.gmra.mrb[0].mxu0 %v493
    %v622 = vpop.f32.mrb[0].mxu0
    %v623 = vadd.f32 0.0, %v622
    %v624 = vpop.f32.mrb[0].mxu0
    %625 = vmatprep.mubr.f32.mxu0 0.0
    %626 = vmatmul.mubr.f32.gmra.mrb[0].mxu0 %v496
    %v627 = vpop.f32.mrb[0].mxu0
    %v628 = vadd.f32 0.0, %v627
    %v629 = vpop.f32.mrb[0].mxu0
    %630 = vmatprep.mubr.f32.mxu0 0.0
    %631 = vmatmul.mubr.f32.gmra.mrb[0].mxu0 %v499
    %v632 = vpop.f32.mrb[0].mxu0
    %v633 = vadd.f32 0.0, %v632
    %v634 = vpop.f32.mrb[0].mxu0
    %635 = vmatprep.mubr.f32.mxu0 0.0
    %636 = vmatmul.mubr.f32.gmra.mrb[0].mxu0 %v502
    %v637 = vpop.f32.mrb[0].mxu0
    %v638 = vadd.f32 0.0, %v637
    %v639 = vpop.f32.mrb[0].mxu0
    %640 = vmatprep.mubr.f32.mxu0 0.0
    %641 = vmatmul.mubr.f32.gmra.mrb[0].mxu0 %v505
    %v642 = vpop.f32.mrb[0].mxu0
    %v643 = vadd.f32 0.0, %v642
    %v644 = vpop.f32.mrb[0].mxu0
    %645 = vmatprep.mubr.f32.mxu0 0.0
    %646 = vmatmul.mubr.f32.gmra.mrb[0].mxu0 %v508
    %v647 = vpop.f32.mrb[0].mxu0
    %v648 = vadd.f32 0.0, %v647
    %v649 = vpop.f32.mrb[0].mxu0
    %650 = vmatprep.mubr.f32.mxu0 0.0
    %651 = vmatmul.mubr.f32.gmra.mrb[0].mxu0 %v511
    %v652 = vpop.f32.mrb[0].mxu0
    %v653 = vadd.f32 0.0, %v652
    %v654 = vpop.f32.mrb[0].mxu0
    %655 = vmatprep.mubr.f32.mxu0 0.0
    %656 = vmatmul.mubr.f32.gmra.mrb[0].mxu0 %v514
    %v657 = vpop.f32.mrb[0].mxu0
    %v658 = vadd.f32 0.0, %v657
    %v659 = vpop.f32.mrb[0].mxu0
    %660 = vdwg.mxu0
    %v661 = vlaneseq
    %v662 = vshrl.u32 %v661, 7
    %v663 = vsub.s32 0, %v662
    %v664 = vrot.slane %v462, %v663
    %v665 = vmul.f32 %v583, %v664
    %v666 = vmul.f32 %v588, %v664
    %v667 = vmul.f32 %v593, %v664
    %v668 = vmul.f32 %v598, %v664
    %v669 = vmul.f32 %v603, %v664
    %v670 = vmul.f32 %v608, %v664
    %v671 = vmul.f32 %v613, %v664
    %v672 = vmul.f32 %v618, %v664
    %v673 = vmul.f32 %v623, %v664
    %v674 = vmul.f32 %v628, %v664
    %v675 = vmul.f32 %v633, %v664
    %v676 = vmul.f32 %v638, %v664
    %v677 = vmul.f32 %v643, %v664
    %v678 = vmul.f32 %v648, %v664
    %v679 = vmul.f32 %v653, %v664
    %v680 = vmul.f32 %v658, %v664
    %v681 = vlaneseq
    %v682 = vshrl.u32 %v681, 7
    %v683 = vsub.s32 1, %v682
    %v684 = vrot.slane %v462, %v683
    %v685 = vadd.f32 %v665, %v684
    %v686 = vadd.f32 %v666, %v684
    %v687 = vadd.f32 %v667, %v684
    %v688 = vadd.f32 %v668, %v684
    %v689 = vadd.f32 %v669, %v684
    %v690 = vadd.f32 %v670, %v684
    %v691 = vadd.f32 %v671, %v684
    %v692 = vadd.f32 %v672, %v684
    %v693 = vadd.f32 %v673, %v684
    %v694 = vadd.f32 %v674, %v684
    %v695 = vadd.f32 %v675, %v684
    %v696 = vadd.f32 %v676, %v684
    %v697 = vadd.f32 %v677, %v684
    %v698 = vadd.f32 %v678, %v684
    %v699 = vadd.f32 %v679, %v684
    %v700 = vadd.f32 %v680, %v684
    %v701 = vmax.f32 %v685, 0.0
    %v702 = vmax.f32 %v686, 0.0
    %v703 = vmax.f32 %v687, 0.0
    %v704 = vmax.f32 %v688, 0.0
    %v705 = vmax.f32 %v689, 0.0
    %v706 = vmax.f32 %v690, 0.0
    %v707 = vmax.f32 %v691, 0.0
    %v708 = vmax.f32 %v692, 0.0
    %v709 = vmax.f32 %v693, 0.0
    %v710 = vmax.f32 %v694, 0.0
    %v711 = vmax.f32 %v695, 0.0
    %v712 = vmax.f32 %v696, 0.0
    %v713 = vmax.f32 %v697, 0.0
    %v714 = vmax.f32 %v698, 0.0
    %v715 = vmax.f32 %v699, 0.0
    %v716 = vmax.f32 %v700, 0.0
    %v717 = vld [vmem:[%s1] sm:$0xff]
    %v718 = vld [vmem:[%s1 + $0x8] sm:$0xff]
    %v719 = vld [vmem:[%s1 + $0x10] sm:$0xff]
    %v720 = vld [vmem:[%s1 + $0x18] sm:$0xff]
    %v721 = vld [vmem:[%s1 + $0x20] sm:$0xff]
    %v722 = vld [vmem:[%s1 + $0x28] sm:$0xff]
    %v723 = vld [vmem:[%s1 + $0x30] sm:$0xff]
    %v724 = vld [vmem:[%s1 + $0x38] sm:$0xff]
    %v725 = vld [vmem:[%s1 + $0x40] sm:$0xff]
    %v726 = vld [vmem:[%s1 + $0x48] sm:$0xff]
    %v727 = vld [vmem:[%s1 + $0x50] sm:$0xff]
    %v728 = vld [vmem:[%s1 + $0x58] sm:$0xff]
    %v729 = vld [vmem:[%s1 + $0x60] sm:$0xff]
    %v730 = vld [vmem:[%s1 + $0x68] sm:$0xff]
    %v731 = vld [vmem:[%s1 + $0x70] sm:$0xff]
    %v732 = vld [vmem:[%s1 + $0x78] sm:$0xff]
    %v733 = vadd.f32 %v701, %v717
    %v734 = vadd.f32 %v702, %v718
    %v735 = vadd.f32 %v703, %v719
    %v736 = vadd.f32 %v704, %v720
    %v737 = vadd.f32 %v705, %v721
    %v738 = vadd.f32 %v706, %v722
    %v739 = vadd.f32 %v707, %v723
    %v740 = vadd.f32 %v708, %v724
    %v741 = vadd.f32 %v709, %v725
    %v742 = vadd.f32 %v710, %v726
    %v743 = vadd.f32 %v711, %v727
    %v744 = vadd.f32 %v712, %v728
    %v745 = vadd.f32 %v713, %v729
    %v746 = vadd.f32 %v714, %v730
    %v747 = vadd.f32 %v715, %v731
    %v748 = vadd.f32 %v716, %v732
    %v766 = vrot.slane 0.0, 7
    %v767 = vrot.slane %v733, 7
    %v768 = vrot.slane %v734, 7
    %v769 = vrot.slane %v735, 7
    %v770 = vrot.slane %v736, 7
    %v771 = vrot.slane %v737, 7
    %v772 = vrot.slane %v738, 7
    %v773 = vrot.slane %v739, 7
    %v774 = vrot.slane %v740, 7
    %v775 = vrot.slane %v741, 7
    %v776 = vrot.slane %v742, 7
    %v777 = vrot.slane %v743, 7
    %v778 = vrot.slane %v744, 7
    %v779 = vrot.slane %v745, 7
    %v780 = vrot.slane %v746, 7
    %v781 = vrot.slane %v747, 7
    %v782 = vrot.slane %v748, 7
    %vm800 = vcmask 1040384
    %v801 = vsel %vm800, 0.0, %v766
    %v802 = vsel %vm800, 0.0, %v767
    %v803 = vsel %vm800, 0.0, %v768
    %v804 = vsel %vm800, 0.0, %v769
    %v805 = vsel %vm800, 0.0, %v770
    %v806 = vsel %vm800, 0.0, %v771
    %v807 = vsel %vm800, 0.0, %v772
    %v808 = vsel %vm800, 0.0, %v773
    %v809 = vsel %vm800, 0.0, %v774
    %v810 = vsel %vm800, 0.0, %v775
    %v811 = vsel %vm800, 0.0, %v776
    %v812 = vsel %vm800, 0.0, %v777
    %v813 = vsel %vm800, 0.0, %v778
    %v814 = vsel %vm800, 0.0, %v779
    %v815 = vsel %vm800, 0.0, %v780
    %v816 = vsel %vm800, 0.0, %v781
    %v817 = vsel %vm800, 0.0, %v782
    %v818 = vsel %vm800, %v766, 0.0
    %v819 = vsel %vm800, %v767, 0.0
    %v820 = vsel %vm800, %v768, 0.0
    %v821 = vsel %vm800, %v769, 0.0
    %v822 = vsel %vm800, %v770, 0.0
    %v823 = vsel %vm800, %v771, 0.0
    %v824 = vsel %vm800, %v772, 0.0
    %v825 = vsel %vm800, %v773, 0.0
    %v826 = vsel %vm800, %v774, 0.0
    %v827 = vsel %vm800, %v775, 0.0
    %v828 = vsel %vm800, %v776, 0.0
    %v829 = vsel %vm800, %v777, 0.0
    %v830 = vsel %vm800, %v778, 0.0
    %v831 = vsel %vm800, %v779, 0.0
    %v832 = vsel %vm800, %v780, 0.0
    %v833 = vsel %vm800, %v781, 0.0
    %v834 = vsel %vm800, %v782, 0.0
    %v865 = vrot.slane %v801, 1
    %v866 = vrot.slane %v818, 1
    %v867 = vsel %vm177, %v865, %v866
    %v868 = vrot.slane %v802, 1
    %v869 = vrot.slane %v819, 1
    %v870 = vsel %vm177, %v868, %v869
    %v871 = vrot.slane %v803, 1
    %v872 = vrot.slane %v820, 1
    %v873 = vsel %vm177, %v871, %v872
    %v874 = vrot.slane %v804, 1
    %v875 = vrot.slane %v821, 1
    %v876 = vsel %vm177, %v874, %v875
    %v877 = vrot.slane %v805, 1
    %v878 = vrot.slane %v822, 1
    %v879 = vsel %vm177, %v877, %v878
    %v880 = vrot.slane %v806, 1
    %v881 = vrot.slane %v823, 1
    %v882 = vsel %vm177, %v880, %v881
    %v883 = vrot.slane %v807, 1
    %v884 = vrot.slane %v824, 1
    %v885 = vsel %vm177, %v883, %v884
    %v886 = vrot.slane %v808, 1
    %v887 = vrot.slane %v825, 1
    %v888 = vsel %vm177, %v886, %v887
    %v889 = vrot.slane %v810, 1
    %v890 = vrot.slane %v827, 1
    %v891 = vsel %vm177, %v889, %v890
    %v892 = vrot.slane %v811, 1
    %v893 = vrot.slane %v828, 1
    %v894 = vsel %vm177, %v892, %v893
    %v895 = vrot.slane %v812, 1
    %v896 = vrot.slane %v829, 1
    %v897 = vsel %vm177, %v895, %v896
    %v898 = vrot.slane %v813, 1
    %v899 = vrot.slane %v830, 1
    %v900 = vsel %vm177, %v898, %v899
    %v901 = vrot.slane %v814, 1
    %v902 = vrot.slane %v831, 1
    %v903 = vsel %vm177, %v901, %v902
    %v904 = vrot.slane %v815, 1
    %v905 = vrot.slane %v832, 1
    %v906 = vsel %vm177, %v904, %v905
    %v907 = vrot.slane %v816, 1
    %v908 = vrot.slane %v833, 1
    %v909 = vsel %vm177, %v907, %v908
    %vm910 = vcmask 1045504
    %v911 = vrot.slane %v801, 2
    %v912 = vrot.slane %v818, 2
    %v913 = vsel %vm910, %v911, %v912
    %v914 = vrot.slane %v802, 2
    %v915 = vrot.slane %v819, 2
    %v916 = vsel %vm910, %v914, %v915
    %v917 = vrot.slane %v803, 2
    %v918 = vrot.slane %v820, 2
    %v919 = vsel %vm910, %v917, %v918
    %v920 = vrot.slane %v804, 2
    %v921 = vrot.slane %v821, 2
    %v922 = vsel %vm910, %v920, %v921
    %v923 = vrot.slane %v805, 2
    %v924 = vrot.slane %v822, 2
    %v925 = vsel %vm910, %v923, %v924
    %v926 = vrot.slane %v806, 2
    %v927 = vrot.slane %v823, 2
    %v928 = vsel %vm910, %v926, %v927
    %v929 = vrot.slane %v807, 2
    %v930 = vrot.slane %v824, 2
    %v931 = vsel %vm910, %v929, %v930
    %v932 = vrot.slane %v808, 2
    %v933 = vrot.slane %v825, 2
    %v934 = vsel %vm910, %v932, %v933
    %v935 = vrot.slane %v810, 2
    %v936 = vrot.slane %v827, 2
    %v937 = vsel %vm910, %v935, %v936
    %v938 = vrot.slane %v811, 2
    %v939 = vrot.slane %v828, 2
    %v940 = vsel %vm910, %v938, %v939
    %v941 = vrot.slane %v812, 2
    %v942 = vrot.slane %v829, 2
    %v943 = vsel %vm910, %v941, %v942
    %v944 = vrot.slane %v813, 2
    %v945 = vrot.slane %v830, 2
    %v946 = vsel %vm910, %v944, %v945
    %v947 = vrot.slane %v814, 2
    %v948 = vrot.slane %v831, 2
    %v949 = vsel %vm910, %v947, %v948
    %v950 = vrot.slane %v815, 2
    %v951 = vrot.slane %v832, 2
    %v952 = vsel %vm910, %v950, %v951
    %v953 = vrot.slane %v816, 2
    %v954 = vrot.slane %v833, 2
    %v955 = vsel %vm910, %v953, %v954
    %v975 = vrot.slane %v809, 1
    %v976 = vrot.slane %v826, 1
    %v977 = vsel %vm177, %v975, %v976
    %v978 = vrot.slane %v817, 1
    %v979 = vrot.slane %v834, 1
    %v980 = vsel %vm177, %v978, %v979
    %v997 = vrot.slane %v809, 2
    %v998 = vrot.slane %v826, 2
    %v999 = vsel %vm910, %v997, %v998
    %v1000 = vrot.slane %v817, 2
    %v1001 = vrot.slane %v834, 2
    %v1002 = vsel %vm910, %v1000, %v1001
    %1003 = vrot.lane.b32.xlu0 %v867, 64
    %v1004 = vpop.permute.xlu0 %1003
    %1005 = vrot.lane.b32.xlu0 %v870, 64
    %v1006 = vpop.permute.xlu0 %1005
    %1007 = vrot.lane.b32.xlu0 %v873, 64
    %v1008 = vpop.permute.xlu0 %1007
    %1009 = vrot.lane.b32.xlu0 %v876, 64
    %v1010 = vpop.permute.xlu0 %1009
    %1011 = vrot.lane.b32.xlu0 %v879, 64
    %v1012 = vpop.permute.xlu0 %1011
    %1013 = vrot.lane.b32.xlu0 %v882, 64
    %v1014 = vpop.permute.xlu0 %1013
    %1015 = vrot.lane.b32.xlu0 %v885, 64
    %v1016 = vpop.permute.xlu0 %1015
    %1017 = vrot.lane.b32.xlu0 %v888, 64
    %v1018 = vpop.permute.xlu0 %1017
    %1019 = vrot.lane.b32.xlu0 %v891, 64
    %v1020 = vpop.permute.xlu0 %1019
    %1021 = vrot.lane.b32.xlu0 %v894, 64
    %v1022 = vpop.permute.xlu0 %1021
    %1023 = vrot.lane.b32.xlu0 %v897, 64
    %v1024 = vpop.permute.xlu0 %1023
    %1025 = vrot.lane.b32.xlu0 %v900, 64
    %v1026 = vpop.permute.xlu0 %1025
    %1027 = vrot.lane.b32.xlu0 %v903, 64
    %v1028 = vpop.permute.xlu0 %1027
    %1029 = vrot.lane.b32.xlu0 %v906, 64
    %v1030 = vpop.permute.xlu0 %1029
    %1031 = vrot.lane.b32.xlu0 %v909, 64
    %v1032 = vpop.permute.xlu0 %1031
    %1048 = vrot.lane.b32.xlu0 %v802, 64
    %v1049 = vpop.permute.xlu0 %1048
    %1050 = vrot.lane.b32.xlu0 %v803, 64
    %v1051 = vpop.permute.xlu0 %1050
    %1052 = vrot.lane.b32.xlu0 %v804, 64
    %v1053 = vpop.permute.xlu0 %1052
    %1054 = vrot.lane.b32.xlu0 %v805, 64
    %v1055 = vpop.permute.xlu0 %1054
    %1056 = vrot.lane.b32.xlu0 %v806, 64
    %v1057 = vpop.permute.xlu0 %1056
    %1058 = vrot.lane.b32.xlu0 %v807, 64
    %v1059 = vpop.permute.xlu0 %1058
    %1060 = vrot.lane.b32.xlu0 %v808, 64
    %v1061 = vpop.permute.xlu0 %1060
    %1062 = vrot.lane.b32.xlu0 %v809, 64
    %v1063 = vpop.permute.xlu0 %1062
    %1064 = vrot.lane.b32.xlu0 %v810, 64
    %v1065 = vpop.permute.xlu0 %1064
    %1066 = vrot.lane.b32.xlu0 %v811, 64
    %v1067 = vpop.permute.xlu0 %1066
    %1068 = vrot.lane.b32.xlu0 %v812, 64
    %v1069 = vpop.permute.xlu0 %1068
    %1070 = vrot.lane.b32.xlu0 %v813, 64
    %v1071 = vpop.permute.xlu0 %1070
    %1072 = vrot.lane.b32.xlu0 %v814, 64
    %v1073 = vpop.permute.xlu0 %1072
    %1074 = vrot.lane.b32.xlu0 %v815, 64
    %v1075 = vpop.permute.xlu0 %1074
    %1076 = vrot.lane.b32.xlu0 %v816, 64
    %v1077 = vpop.permute.xlu0 %1076
    %1078 = vrot.lane.b32.xlu0 %v817, 64
    %v1079 = vpop.permute.xlu0 %1078
    %1096 = vrot.lane.b32.xlu0 %v916, 64
    %v1097 = vpop.permute.xlu0 %1096
    %1098 = vrot.lane.b32.xlu0 %v919, 64
    %v1099 = vpop.permute.xlu0 %1098
    %1100 = vrot.lane.b32.xlu0 %v922, 64
    %v1101 = vpop.permute.xlu0 %1100
    %1102 = vrot.lane.b32.xlu0 %v925, 64
    %v1103 = vpop.permute.xlu0 %1102
    %1104 = vrot.lane.b32.xlu0 %v928, 64
    %v1105 = vpop.permute.xlu0 %1104
    %1106 = vrot.lane.b32.xlu0 %v931, 64
    %v1107 = vpop.permute.xlu0 %1106
    %1108 = vrot.lane.b32.xlu0 %v934, 64
    %v1109 = vpop.permute.xlu0 %1108
    %1110 = vrot.lane.b32.xlu0 %v999, 64
    %v1111 = vpop.permute.xlu0 %1110
    %1112 = vrot.lane.b32.xlu0 %v937, 64
    %v1113 = vpop.permute.xlu0 %1112
    %1114 = vrot.lane.b32.xlu0 %v940, 64
    %v1115 = vpop.permute.xlu0 %1114
    %1116 = vrot.lane.b32.xlu0 %v943, 64
    %v1117 = vpop.permute.xlu0 %1116
    %1118 = vrot.lane.b32.xlu0 %v946, 64
    %v1119 = vpop.permute.xlu0 %1118
    %1120 = vrot.lane.b32.xlu0 %v949, 64
    %v1121 = vpop.permute.xlu0 %1120
    %1122 = vrot.lane.b32.xlu0 %v952, 64
    %v1123 = vpop.permute.xlu0 %1122
    %1124 = vrot.lane.b32.xlu0 %v955, 64
    %v1125 = vpop.permute.xlu0 %1124
    %1126 = vrot.lane.b32.xlu0 %v1002, 64
    %v1127 = vpop.permute.xlu0 %1126
    %1144 = vrot.lane.b32.xlu0 %v977, 64
    %v1145 = vpop.permute.xlu0 %1144
    %1146 = vrot.lane.b32.xlu0 %v980, 64
    %v1147 = vpop.permute.xlu0 %1146
    %vm1150 = vcmask 523264
    %v1151 = vsel %vm1150, %v801, %v1004
    %v1152 = vsel %vm1150, %v802, %v1006
    %v1153 = vsel %vm1150, %v803, %v1008
    %v1154 = vsel %vm1150, %v804, %v1010
    %v1155 = vsel %vm1150, %v805, %v1012
    %v1156 = vsel %vm1150, %v806, %v1014
    %v1157 = vsel %vm1150, %v807, %v1016
    %v1158 = vsel %vm1150, %v808, %v1018
    %v1159 = vsel %vm1150, %v810, %v1020
    %v1160 = vsel %vm1150, %v811, %v1022
    %v1161 = vsel %vm1150, %v812, %v1024
    %v1162 = vsel %vm1150, %v813, %v1026
    %v1163 = vsel %vm1150, %v814, %v1028
    %v1164 = vsel %vm1150, %v815, %v1030
    %v1165 = vsel %vm1150, %v816, %v1032
    %v1166 = vsel %vm1150, %v913, %v1049
    %v1167 = vsel %vm1150, %v916, %v1051
    %v1168 = vsel %vm1150, %v919, %v1053
    %v1169 = vsel %vm1150, %v922, %v1055
    %v1170 = vsel %vm1150, %v925, %v1057
    %v1171 = vsel %vm1150, %v928, %v1059
    %v1172 = vsel %vm1150, %v931, %v1061
    %v1173 = vsel %vm1150, %v934, %v1063
    %v1174 = vsel %vm1150, %v913, %v1065
    %v1175 = vsel %vm1150, %v937, %v1067
    %v1176 = vsel %vm1150, %v940, %v1069
    %v1177 = vsel %vm1150, %v943, %v1071
    %v1178 = vsel %vm1150, %v946, %v1073
    %v1179 = vsel %vm1150, %v949, %v1075
    %v1180 = vsel %vm1150, %v952, %v1077
    %v1181 = vsel %vm1150, %v955, %v1079
    %v1182 = vsel %vm1150, %v870, %v1097
    %v1183 = vsel %vm1150, %v873, %v1099
    %v1184 = vsel %vm1150, %v876, %v1101
    %v1185 = vsel %vm1150, %v879, %v1103
    %v1186 = vsel %vm1150, %v882, %v1105
    %v1187 = vsel %vm1150, %v885, %v1107
    %v1188 = vsel %vm1150, %v888, %v1109
    %v1189 = vsel %vm1150, %v977, %v1111
    %v1190 = vsel %vm1150, %v891, %v1113
    %v1191 = vsel %vm1150, %v894, %v1115
    %v1192 = vsel %vm1150, %v897, %v1117
    %v1193 = vsel %vm1150, %v900, %v1119
    %v1194 = vsel %vm1150, %v903, %v1121
    %v1195 = vsel %vm1150, %v906, %v1123
    %v1196 = vsel %vm1150, %v909, %v1125
    %v1197 = vsel %vm1150, %v980, %v1127
    %v1198 = vsel %vm1150, %v809, %v1145
    %v1199 = vsel %vm1150, %v817, %v1147
    %v1200 = vld [vmem:[%s5] sm:$0x3]
    %v1201 = vld [vmem:[%s4] sm:$0xff]
    %v1202 = vld [vmem:[%s4 + $0x8] sm:$0xff]
    %v1203 = vld [vmem:[%s4 + $0x10] sm:$0xff]
    %v1204 = vld [vmem:[%s4 + $0x18] sm:$0xff]
    %v1205 = vld [vmem:[%s4 + $0x20] sm:$0xff]
    %v1206 = vld [vmem:[%s4 + $0x28] sm:$0xff]
    %v1207 = vld [vmem:[%s4 + $0x30] sm:$0xff]
    %v1208 = vld [vmem:[%s4 + $0x38] sm:$0xff]
    %v1209 = vld [vmem:[%s4 + $0x40] sm:$0xff]
    %v1210 = vld [vmem:[%s4 + $0x48] sm:$0xff]
    %v1211 = vld [vmem:[%s4 + $0x50] sm:$0xff]
    %v1212 = vld [vmem:[%s4 + $0x58] sm:$0xff]
    %v1213 = vld [vmem:[%s4 + $0x60] sm:$0xff]
    %v1214 = vld [vmem:[%s4 + $0x68] sm:$0xff]
    %v1215 = vld [vmem:[%s4 + $0x70] sm:$0xff]
    %v1216 = vld [vmem:[%s4 + $0x78] sm:$0xff]
    %v1217 = vld [vmem:[%s4 + $0x80] sm:$0xff]
    %v1218 = vld [vmem:[%s4 + $0x88] sm:$0xff]
    %v1219 = vld [vmem:[%s4 + $0x90] sm:$0xff]
    %v1220 = vld [vmem:[%s4 + $0x98] sm:$0xff]
    %v1221 = vld [vmem:[%s4 + $0xa0] sm:$0xff]
    %v1222 = vld [vmem:[%s4 + $0xa8] sm:$0xff]
    %v1223 = vld [vmem:[%s4 + $0xb0] sm:$0xff]
    %v1224 = vld [vmem:[%s4 + $0xb8] sm:$0xff]
    %v1225 = vld [vmem:[%s4 + $0xc0] sm:$0xff]
    %v1226 = vld [vmem:[%s4 + $0xc8] sm:$0xff]
    %v1227 = vld [vmem:[%s4 + $0xd0] sm:$0xff]
    %v1228 = vld [vmem:[%s4 + $0xd8] sm:$0xff]
    %v1229 = vld [vmem:[%s4 + $0xe0] sm:$0xff]
    %v1230 = vld [vmem:[%s4 + $0xe8] sm:$0xff]
    %v1231 = vld [vmem:[%s4 + $0xf0] sm:$0xff]
    %v1232 = vld [vmem:[%s4 + $0xf8] sm:$0xff]
    %v1233 = vld [vmem:[%s4 + $0x100] sm:$0xff]
    %v1234 = vld [vmem:[%s4 + $0x108] sm:$0xff]
    %v1235 = vld [vmem:[%s4 + $0x110] sm:$0xff]
    %v1236 = vld [vmem:[%s4 + $0x118] sm:$0xff]
    %v1237 = vld [vmem:[%s4 + $0x120] sm:$0xff]
    %v1238 = vld [vmem:[%s4 + $0x128] sm:$0xff]
    %v1239 = vld [vmem:[%s4 + $0x130] sm:$0xff]
    %v1240 = vld [vmem:[%s4 + $0x138] sm:$0xff]
    %v1241 = vld [vmem:[%s4 + $0x140] sm:$0xff]
    %v1242 = vld [vmem:[%s4 + $0x148] sm:$0xff]
    %v1243 = vld [vmem:[%s4 + $0x150] sm:$0xff]
    %v1244 = vld [vmem:[%s4 + $0x158] sm:$0xff]
    %v1245 = vld [vmem:[%s4 + $0x160] sm:$0xff]
    %v1246 = vld [vmem:[%s4 + $0x168] sm:$0xff]
    %v1247 = vld [vmem:[%s4 + $0x170] sm:$0xff]
    %v1248 = vld [vmem:[%s4 + $0x178] sm:$0xff]
    %v1249 = vld [vmem:[%s4 + $0x180] sm:$0xff]
    %v1250 = vld [vmem:[%s4 + $0x188] sm:$0xff]
    %v1251 = vld [vmem:[%s4 + $0x190] sm:$0xff]
    %v1252 = vld [vmem:[%s4 + $0x198] sm:$0xff]
    %v1253 = vld [vmem:[%s4 + $0x1a0] sm:$0xff]
    %v1254 = vld [vmem:[%s4 + $0x1a8] sm:$0xff]
    %v1255 = vld [vmem:[%s4 + $0x1b0] sm:$0xff]
    %v1256 = vld [vmem:[%s4 + $0x1b8] sm:$0xff]
    %v1257 = vld [vmem:[%s4 + $0x1c0] sm:$0xff]
    %v1258 = vld [vmem:[%s4 + $0x1c8] sm:$0xff]
    %v1259 = vld [vmem:[%s4 + $0x1d0] sm:$0xff]
    %v1260 = vld [vmem:[%s4 + $0x1d8] sm:$0xff]
    %v1261 = vld [vmem:[%s4 + $0x1e0] sm:$0xff]
    %v1262 = vld [vmem:[%s4 + $0x1e8] sm:$0xff]
    %v1263 = vld [vmem:[%s4 + $0x1f0] sm:$0xff]
    %v1264 = vld [vmem:[%s4 + $0x1f8] sm:$0xff]
    %v1265 = vld [vmem:[%s4 + $0x200] sm:$0xff]
    %v1266 = vld [vmem:[%s4 + $0x208] sm:$0xff]
    %v1267 = vld [vmem:[%s4 + $0x210] sm:$0xff]
    %v1268 = vld [vmem:[%s4 + $0x218] sm:$0xff]
    %v1269 = vld [vmem:[%s4 + $0x220] sm:$0xff]
    %v1270 = vld [vmem:[%s4 + $0x228] sm:$0xff]
    %v1271 = vld [vmem:[%s4 + $0x230] sm:$0xff]
    %v1272 = vld [vmem:[%s4 + $0x238] sm:$0xff]
    %v1273 = vsel %vm1150, %v919, 0
    %v1275 = vsel %vm1150, %v922, 0
    %v1277 = vsel %vm1150, %v925, 0
    %v1279 = vsel %vm1150, %v928, 0
    %v1281 = vsel %vm1150, %v931, 0
    %v1283 = vsel %vm1150, %v934, 0
    %v1285 = vsel %vm1150, %v999, 0
    %v1287 = vsel %vm1150, %v913, 0
    %v1289 = vsel %vm1150, %v940, 0
    %v1291 = vsel %vm1150, %v943, 0
    %v1293 = vsel %vm1150, %v946, 0
    %v1295 = vsel %vm1150, %v949, 0
    %v1297 = vsel %vm1150, %v952, 0
    %v1299 = vsel %vm1150, %v955, 0
    %v1301 = vsel %vm1150, %v1002, 0
    %1303 = vmatprep.subr.mxu0 0.0
    %1304 = vmatpush1.msra.mxu0 %v1201
    %1305 = vmatprep.subr.mxu0 0.0
    %1306 = vmatpush1.msra.mxu0 %v1202
    %1307 = vmatprep.subr.mxu0 0.0
    %1308 = vmatpush1.msra.mxu0 %v1203
    %1309 = vmatprep.subr.mxu0 0.0
    %1310 = vmatpush1.msra.mxu0 %v1204
    %1311 = vmatprep.subr.mxu0 0.0
    %1312 = vmatpush1.msra.mxu0 %v1205
    %1313 = vmatprep.subr.mxu0 0.0
    %1314 = vmatpush1.msra.mxu0 %v1206
    %1315 = vmatprep.subr.mxu0 0.0
    %1316 = vmatpush1.msra.mxu0 %v1207
    %1317 = vmatprep.subr.mxu0 0.0
    %1318 = vmatpush1.msra.mxu0 %v1208
    %1319 = vmatprep.subr.mxu0 0.0
    %1320 = vmatpush1.msra.mxu0 %v1209
    %1321 = vmatprep.subr.mxu0 0.0
    %1322 = vmatpush1.msra.mxu0 %v1210
    %1323 = vmatprep.subr.mxu0 0.0
    %1324 = vmatpush1.msra.mxu0 %v1211
    %1325 = vmatprep.subr.mxu0 0.0
    %1326 = vmatpush1.msra.mxu0 %v1212
    %1327 = vmatprep.subr.mxu0 0.0
    %1328 = vmatpush1.msra.mxu0 %v1213
    %1329 = vmatprep.subr.mxu0 0.0
    %1330 = vmatpush1.msra.mxu0 %v1214
    %1331 = vmatprep.subr.mxu0 0.0
    %1332 = vmatpush1.msra.mxu0 %v1215
    %1333 = vmatprep.subr.mxu0 0.0
    %1334 = vmatpush1.msra.mxu0 %v1216
    %1335 = vmatprep.subr.mxu0 0.0
    %1336 = vmatpush1.msra.mxu0 %v1217
    %1337 = vmatprep.subr.mxu0 0.0
    %1338 = vmatpush1.msra.mxu0 %v1218
    %1339 = vmatprep.subr.mxu0 0.0
    %1340 = vmatpush1.msra.mxu0 %v1219
    %1341 = vmatprep.subr.mxu0 0.0
    %1342 = vmatpush1.msra.mxu0 %v1220
    %1343 = vmatprep.subr.mxu0 0.0
    %1344 = vmatpush1.msra.mxu0 %v1221
    %1345 = vmatprep.subr.mxu0 0.0
    %1346 = vmatpush1.msra.mxu0 %v1222
    %1347 = vmatprep.subr.mxu0 0.0
    %1348 = vmatpush1.msra.mxu0 %v1223
    %1349 = vmatprep.subr.mxu0 0.0
    %1350 = vmatpush1.msra.mxu0 %v1224
    %1351 = vmatprep.subr.mxu0 0.0
    %1352 = vmatpush1.msra.mxu0 %v1225
    %1353 = vmatprep.subr.mxu0 0.0
    %1354 = vmatpush1.msra.mxu0 %v1226
    %1355 = vmatprep.subr.mxu0 0.0
    %1356 = vmatpush1.msra.mxu0 %v1227
    %1357 = vmatprep.subr.mxu0 0.0
    %1358 = vmatpush1.msra.mxu0 %v1228
    %1359 = vmatprep.subr.mxu0 0.0
    %1360 = vmatpush1.msra.mxu0 %v1229
    %1361 = vmatprep.subr.mxu0 0.0
    %1362 = vmatpush1.msra.mxu0 %v1230
    %1363 = vmatprep.subr.mxu0 0.0
    %1364 = vmatpush1.msra.mxu0 %v1231
    %1365 = vmatprep.subr.mxu0 0.0
    %1366 = vmatpush1.msra.mxu0 %v1232
    %1367 = vmatprep.mubr.f32.mxu0 %v1166
    %1368 = vmatmul.mubr.f32.gmra.mrb[0].mxu0 %v1151
    %v1369 = vpop.f32.mrb[0].mxu0
    %v1370 = vadd.f32 0.0, %v1369
    %v1371 = vpop.f32.mrb[0].mxu0
    %1372 = vmatprep.mubr.f32.mxu0 %v1167
    %1373 = vmatmul.mubr.f32.gmra.mrb[0].mxu0 %v1152
    %v1374 = vpop.f32.mrb[0].mxu0
    %v1375 = vadd.f32 0.0, %v1374
    %v1376 = vpop.f32.mrb[0].mxu0
    %1377 = vmatprep.mubr.f32.mxu0 %v1168
    %1378 = vmatmul.mubr.f32.gmra.mrb[0].mxu0 %v1153
    %v1379 = vpop.f32.mrb[0].mxu0
    %v1380 = vadd.f32 0.0, %v1379
    %v1381 = vpop.f32.mrb[0].mxu0
    %1382 = vmatprep.mubr.f32.mxu0 %v1169
    %1383 = vmatmul.mubr.f32.gmra.mrb[0].mxu0 %v1154
    %v1384 = vpop.f32.mrb[0].mxu0
    %v1385 = vadd.f32 0.0, %v1384
    %v1386 = vpop.f32.mrb[0].mxu0
    %1387 = vmatprep.mubr.f32.mxu0 %v1170
    %1388 = vmatmul.mubr.f32.gmra.mrb[0].mxu0 %v1155
    %v1389 = vpop.f32.mrb[0].mxu0
    %v1390 = vadd.f32 0.0, %v1389
    %v1391 = vpop.f32.mrb[0].mxu0
    %1392 = vmatprep.mubr.f32.mxu0 %v1171
    %1393 = vmatmul.mubr.f32.gmra.mrb[0].mxu0 %v1156
    %v1394 = vpop.f32.mrb[0].mxu0
    %v1395 = vadd.f32 0.0, %v1394
    %v1396 = vpop.f32.mrb[0].mxu0
    %1397 = vmatprep.mubr.f32.mxu0 %v1172
    %1398 = vmatmul.mubr.f32.gmra.mrb[0].mxu0 %v1157
    %v1399 = vpop.f32.mrb[0].mxu0
    %v1400 = vadd.f32 0.0, %v1399
    %v1401 = vpop.f32.mrb[0].mxu0
    %1402 = vmatprep.mubr.f32.mxu0 %v1173
    %1403 = vmatmul.mubr.f32.gmra.mrb[0].mxu0 %v1158
    %v1404 = vpop.f32.mrb[0].mxu0
    %v1405 = vadd.f32 0.0, %v1404
    %v1406 = vpop.f32.mrb[0].mxu0
    %1407 = vmatprep.mubr.f32.mxu0 %v1174
    %1408 = vmatmul.mubr.f32.gmra.mrb[0].mxu0 %v1151
    %v1409 = vpop.f32.mrb[0].mxu0
    %v1410 = vadd.f32 0.0, %v1409
    %v1411 = vpop.f32.mrb[0].mxu0
    %1412 = vmatprep.mubr.f32.mxu0 %v1175
    %1413 = vmatmul.mubr.f32.gmra.mrb[0].mxu0 %v1159
    %v1414 = vpop.f32.mrb[0].mxu0
    %v1415 = vadd.f32 0.0, %v1414
    %v1416 = vpop.f32.mrb[0].mxu0
    %1417 = vmatprep.mubr.f32.mxu0 %v1176
    %1418 = vmatmul.mubr.f32.gmra.mrb[0].mxu0 %v1160
    %v1419 = vpop.f32.mrb[0].mxu0
    %v1420 = vadd.f32 0.0, %v1419
    %v1421 = vpop.f32.mrb[0].mxu0
    %1422 = vmatprep.mubr.f32.mxu0 %v1177
    %1423 = vmatmul.mubr.f32.gmra.mrb[0].mxu0 %v1161
    %v1424 = vpop.f32.mrb[0].mxu0
    %v1425 = vadd.f32 0.0, %v1424
    %v1426 = vpop.f32.mrb[0].mxu0
    %1427 = vmatprep.mubr.f32.mxu0 %v1178
    %1428 = vmatmul.mubr.f32.gmra.mrb[0].mxu0 %v1162
    %v1429 = vpop.f32.mrb[0].mxu0
    %v1430 = vadd.f32 0.0, %v1429
    %v1431 = vpop.f32.mrb[0].mxu0
    %1432 = vmatprep.mubr.f32.mxu0 %v1179
    %1433 = vmatmul.mubr.f32.gmra.mrb[0].mxu0 %v1163
    %v1434 = vpop.f32.mrb[0].mxu0
    %v1435 = vadd.f32 0.0, %v1434
    %v1436 = vpop.f32.mrb[0].mxu0
    %1437 = vmatprep.mubr.f32.mxu0 %v1180
    %1438 = vmatmul.mubr.f32.gmra.mrb[0].mxu0 %v1164
    %v1439 = vpop.f32.mrb[0].mxu0
    %v1440 = vadd.f32 0.0, %v1439
    %v1441 = vpop.f32.mrb[0].mxu0
    %1442 = vmatprep.mubr.f32.mxu0 %v1181
    %1443 = vmatmul.mubr.f32.gmra.mrb[0].mxu0 %v1165
    %v1444 = vpop.f32.mrb[0].mxu0
    %v1445 = vadd.f32 0.0, %v1444
    %v1446 = vpop.f32.mrb[0].mxu0
    %1447 = vdwg.mxu0
    %1448 = vmatprep.subr.mxu0 0.0
    %1449 = vmatpush1.msra.mxu0 %v1233
    %1450 = vmatprep.subr.mxu0 0.0
    %1451 = vmatpush1.msra.mxu0 %v1234
    %1452 = vmatprep.subr.mxu0 0.0
    %1453 = vmatpush1.msra.mxu0 %v1235
    %1454 = vmatprep.subr.mxu0 0.0
    %1455 = vmatpush1.msra.mxu0 %v1236
    %1456 = vmatprep.subr.mxu0 0.0
    %1457 = vmatpush1.msra.mxu0 %v1237
    %1458 = vmatprep.subr.mxu0 0.0
    %1459 = vmatpush1.msra.mxu0 %v1238
    %1460 = vmatprep.subr.mxu0 0.0
    %1461 = vmatpush1.msra.mxu0 %v1239
    %1462 = vmatprep.subr.mxu0 0.0
    %1463 = vmatpush1.msra.mxu0 %v1240
    %1464 = vmatprep.subr.mxu0 0.0
    %1465 = vmatpush1.msra.mxu0 %v1241
    %1466 = vmatprep.subr.mxu0 0.0
    %1467 = vmatpush1.msra.mxu0 %v1242
    %1468 = vmatprep.subr.mxu0 0.0
    %1469 = vmatpush1.msra.mxu0 %v1243
    %1470 = vmatprep.subr.mxu0 0.0
    %1471 = vmatpush1.msra.mxu0 %v1244
    %1472 = vmatprep.subr.mxu0 0.0
    %1473 = vmatpush1.msra.mxu0 %v1245
    %1474 = vmatprep.subr.mxu0 0.0
    %1475 = vmatpush1.msra.mxu0 %v1246
    %1476 = vmatprep.subr.mxu0 0.0
    %1477 = vmatpush1.msra.mxu0 %v1247
    %1478 = vmatprep.subr.mxu0 0.0
    %1479 = vmatpush1.msra.mxu0 %v1248
    %1480 = vmatprep.subr.mxu0 0.0
    %1481 = vmatpush1.msra.mxu0 %v1249
    %1482 = vmatprep.subr.mxu0 0.0
    %1483 = vmatpush1.msra.mxu0 %v1250
    %1484 = vmatprep.subr.mxu0 0.0
    %1485 = vmatpush1.msra.mxu0 %v1251
    %1486 = vmatprep.subr.mxu0 0.0
    %1487 = vmatpush1.msra.mxu0 %v1252
    %1488 = vmatprep.subr.mxu0 0.0
    %1489 = vmatpush1.msra.mxu0 %v1253
    %1490 = vmatprep.subr.mxu0 0.0
    %1491 = vmatpush1.msra.mxu0 %v1254
    %1492 = vmatprep.subr.mxu0 0.0
    %1493 = vmatpush1.msra.mxu0 %v1255
    %1494 = vmatprep.subr.mxu0 0.0
    %1495 = vmatpush1.msra.mxu0 %v1256
    %1496 = vmatprep.subr.mxu0 0.0
    %1497 = vmatpush1.msra.mxu0 %v1257
    %1498 = vmatprep.subr.mxu0 0.0
    %1499 = vmatpush1.msra.mxu0 %v1258
    %1500 = vmatprep.subr.mxu0 0.0
    %1501 = vmatpush1.msra.mxu0 %v1259
    %1502 = vmatprep.subr.mxu0 0.0
    %1503 = vmatpush1.msra.mxu0 %v1260
    %1504 = vmatprep.subr.mxu0 0.0
    %1505 = vmatpush1.msra.mxu0 %v1261
    %1506 = vmatprep.subr.mxu0 0.0
    %1507 = vmatpush1.msra.mxu0 %v1262
    %1508 = vmatprep.subr.mxu0 0.0
    %1509 = vmatpush1.msra.mxu0 %v1263
    %1510 = vmatprep.subr.mxu0 0.0
    %1511 = vmatpush1.msra.mxu0 %v1264
    %1512 = vmatprep.mubr.f32.mxu0 %v1153
    %1513 = vmatmul.mubr.f32.gmra.mrb[0].mxu0 %v1182
    %v1514 = vpop.f32.mrb[0].mxu0
    %v1515 = vadd.f32 %v1370, %v1514
    %v1516 = vpop.f32.mrb[0].mxu0
    %1517 = vmatprep.mubr.f32.mxu0 %v1154
    %1518 = vmatmul.mubr.f32.gmra.mrb[0].mxu0 %v1183
    %v1519 = vpop.f32.mrb[0].mxu0
    %v1520 = vadd.f32 %v1375, %v1519
    %v1521 = vpop.f32.mrb[0].mxu0
    %1522 = vmatprep.mubr.f32.mxu0 %v1155
    %1523 = vmatmul.mubr.f32.gmra.mrb[0].mxu0 %v1184
    %v1524 = vpop.f32.mrb[0].mxu0
    %v1525 = vadd.f32 %v1380, %v1524
    %v1526 = vpop.f32.mrb[0].mxu0
    %1527 = vmatprep.mubr.f32.mxu0 %v1156
    %1528 = vmatmul.mubr.f32.gmra.mrb[0].mxu0 %v1185
    %v1529 = vpop.f32.mrb[0].mxu0
    %v1530 = vadd.f32 %v1385, %v1529
    %v1531 = vpop.f32.mrb[0].mxu0
    %1532 = vmatprep.mubr.f32.mxu0 %v1157
    %1533 = vmatmul.mubr.f32.gmra.mrb[0].mxu0 %v1186
    %v1534 = vpop.f32.mrb[0].mxu0
    %v1535 = vadd.f32 %v1390, %v1534
    %v1536 = vpop.f32.mrb[0].mxu0
    %1537 = vmatprep.mubr.f32.mxu0 %v1158
    %1538 = vmatmul.mubr.f32.gmra.mrb[0].mxu0 %v1187
    %v1539 = vpop.f32.mrb[0].mxu0
    %v1540 = vadd.f32 %v1395, %v1539
    %v1541 = vpop.f32.mrb[0].mxu0
    %1542 = vmatprep.mubr.f32.mxu0 %v1198
    %1543 = vmatmul.mubr.f32.gmra.mrb[0].mxu0 %v1188
    %v1544 = vpop.f32.mrb[0].mxu0
    %v1545 = vadd.f32 %v1400, %v1544
    %v1546 = vpop.f32.mrb[0].mxu0
    %1547 = vmatprep.mubr.f32.mxu0 %v1151
    %1548 = vmatmul.mubr.f32.gmra.mrb[0].mxu0 %v1189
    %v1549 = vpop.f32.mrb[0].mxu0
    %v1550 = vadd.f32 %v1405, %v1549
    %v1551 = vpop.f32.mrb[0].mxu0
    %1552 = vmatprep.mubr.f32.mxu0 %v1160
    %1553 = vmatmul.mubr.f32.gmra.mrb[0].mxu0 %v1190
    %v1554 = vpop.f32.mrb[0].mxu0
    %v1555 = vadd.f32 %v1410, %v1554
    %v1556 = vpop.f32.mrb[0].mxu0
    %1557 = vmatprep.mubr.f32.mxu0 %v1161
    %1558 = vmatmul.mubr.f32.gmra.mrb[0].mxu0 %v1191
    %v1559 = vpop.f32.mrb[0].mxu0
    %v1560 = vadd.f32 %v1415, %v1559
    %v1561 = vpop.f32.mrb[0].mxu0
    %1562 = vmatprep.mubr.f32.mxu0 %v1162
    %1563 = vmatmul.mubr.f32.gmra.mrb[0].mxu0 %v1192
    %v1564 = vpop.f32.mrb[0].mxu0
    %v1565 = vadd.f32 %v1420, %v1564
    %v1566 = vpop.f32.mrb[0].mxu0
    %1567 = vmatprep.mubr.f32.mxu0 %v1163
    %1568 = vmatmul.mubr.f32.gmra.mrb[0].mxu0 %v1193
    %v1569 = vpop.f32.mrb[0].mxu0
    %v1570 = vadd.f32 %v1425, %v1569
    %v1571 = vpop.f32.mrb[0].mxu0
    %1572 = vmatprep.mubr.f32.mxu0 %v1164
    %1573 = vmatmul.mubr.f32.gmra.mrb[0].mxu0 %v1194
    %v1574 = vpop.f32.mrb[0].mxu0
    %v1575 = vadd.f32 %v1430, %v1574
    %v1576 = vpop.f32.mrb[0].mxu0
    %1577 = vmatprep.mubr.f32.mxu0 %v1165
    %1578 = vmatmul.mubr.f32.gmra.mrb[0].mxu0 %v1195
    %v1579 = vpop.f32.mrb[0].mxu0
    %v1580 = vadd.f32 %v1435, %v1579
    %v1581 = vpop.f32.mrb[0].mxu0
    %1582 = vmatprep.mubr.f32.mxu0 %v1199
    %1583 = vmatmul.mubr.f32.gmra.mrb[0].mxu0 %v1196
    %v1584 = vpop.f32.mrb[0].mxu0
    %v1585 = vadd.f32 %v1440, %v1584
    %v1586 = vpop.f32.mrb[0].mxu0
    %1587 = vmatprep.mubr.f32.mxu0 %v1151
    %1588 = vmatmul.mubr.f32.gmra.mrb[0].mxu0 %v1197
    %v1589 = vpop.f32.mrb[0].mxu0
    %v1590 = vadd.f32 %v1445, %v1589
    %v1591 = vpop.f32.mrb[0].mxu0
    %1592 = vdwg.mxu0
    %1593 = vmatprep.subr.mxu0 0.0
    %1594 = vmatpush1.msra.mxu0 %v1265
    %1595 = vmatprep.subr.mxu0 0.0
    %1596 = vmatpush1.msra.mxu0 %v1266
    %1597 = vmatprep.subr.mxu0 0.0
    %1598 = vmatpush1.msra.mxu0 %v1267
    %1599 = vmatprep.subr.mxu0 0.0
    %1600 = vmatpush1.msra.mxu0 %v1268
    %1601 = vmatprep.subr.mxu0 0.0
    %1602 = vmatpush1.msra.mxu0 %v1269
    %1603 = vmatprep.subr.mxu0 0.0
    %1604 = vmatpush1.msra.mxu0 %v1270
    %1605 = vmatprep.subr.mxu0 0.0
    %1606 = vmatpush1.msra.mxu0 %v1271
    %1607 = vmatprep.subr.mxu0 0.0
    %1608 = vmatpush1.msra.mxu0 %v1272
    %1609 = vmatprep.subr.mxu0 0.0
    %1610 = vmatpush1.msra.mxu0 0.0
    %1611 = vmatprep.subr.mxu0 0.0
    %1612 = vmatpush1.msra.mxu0 0.0
    %1613 = vmatprep.subr.mxu0 0.0
    %1614 = vmatpush1.msra.mxu0 0.0
    %1615 = vmatprep.subr.mxu0 0.0
    %1616 = vmatpush1.msra.mxu0 0.0
    %1617 = vmatprep.subr.mxu0 0.0
    %1618 = vmatpush1.msra.mxu0 0.0
    %1619 = vmatprep.subr.mxu0 0.0
    %1620 = vmatpush1.msra.mxu0 0.0
    %1621 = vmatprep.subr.mxu0 0.0
    %1622 = vmatpush1.msra.mxu0 0.0
    %1623 = vmatprep.subr.mxu0 0.0
    %1624 = vmatpush1.msra.mxu0 0.0
    %1625 = vmatprep.subr.mxu0 0.0
    %1626 = vmatpush1.msra.mxu0 0.0
    %1627 = vmatprep.subr.mxu0 0.0
    %1628 = vmatpush1.msra.mxu0 0.0
    %1629 = vmatprep.subr.mxu0 0.0
    %1630 = vmatpush1.msra.mxu0 0.0
    %1631 = vmatprep.subr.mxu0 0.0
    %1632 = vmatpush1.msra.mxu0 0.0
    %1633 = vmatprep.subr.mxu0 0.0
    %1634 = vmatpush1.msra.mxu0 0.0
    %1635 = vmatprep.subr.mxu0 0.0
    %1636 = vmatpush1.msra.mxu0 0.0
    %1637 = vmatprep.subr.mxu0 0.0
    %1638 = vmatpush1.msra.mxu0 0.0
    %1639 = vmatprep.subr.mxu0 0.0
    %1640 = vmatpush1.msra.mxu0 0.0
    %1641 = vmatprep.subr.mxu0 0.0
    %1642 = vmatpush1.msra.mxu0 0.0
    %1643 = vmatprep.subr.mxu0 0.0
    %1644 = vmatpush1.msra.mxu0 0.0
    %1645 = vmatprep.subr.mxu0 0.0
    %1646 = vmatpush1.msra.mxu0 0.0
    %1647 = vmatprep.subr.mxu0 0.0
    %1648 = vmatpush1.msra.mxu0 0.0
    %1649 = vmatprep.subr.mxu0 0.0
    %1650 = vmatpush1.msra.mxu0 0.0
    %1651 = vmatprep.subr.mxu0 0.0
    %1652 = vmatpush1.msra.mxu0 0.0
    %1653 = vmatprep.subr.mxu0 0.0
    %1654 = vmatpush1.msra.mxu0 0.0
    %1655 = vmatprep.subr.mxu0 0.0
    %1656 = vmatpush1.msra.mxu0 0.0
    %1657 = vmatprep.mubr.f32.mxu0 0.0
    %1658 = vmatmul.mubr.f32.gmra.mrb[0].mxu0 %v1273
    %v1659 = vpop.f32.mrb[0].mxu0
    %v1660 = vadd.f32 %v1515, %v1659
    %v1661 = vpop.f32.mrb[0].mxu0
    %1662 = vmatprep.mubr.f32.mxu0 0.0
    %1663 = vmatmul.mubr.f32.gmra.mrb[0].mxu0 %v1275
    %v1664 = vpop.f32.mrb[0].mxu0
    %v1665 = vadd.f32 %v1520, %v1664
    %v1666 = vpop.f32.mrb[0].mxu0
    %1667 = vmatprep.mubr.f32.mxu0 0.0
    %1668 = vmatmul.mubr.f32.gmra.mrb[0].mxu0 %v1277
    %v1669 = vpop.f32.mrb[0].mxu0
    %v1670 = vadd.f32 %v1525, %v1669
    %v1671 = vpop.f32.mrb[0].mxu0
    %1672 = vmatprep.mubr.f32.mxu0 0.0
    %1673 = vmatmul.mubr.f32.gmra.mrb[0].mxu0 %v1279
    %v1674 = vpop.f32.mrb[0].mxu0
    %v1675 = vadd.f32 %v1530, %v1674
    %v1676 = vpop.f32.mrb[0].mxu0
    %1677 = vmatprep.mubr.f32.mxu0 0.0
    %1678 = vmatmul.mubr.f32.gmra.mrb[0].mxu0 %v1281
    %v1679 = vpop.f32.mrb[0].mxu0
    %v1680 = vadd.f32 %v1535, %v1679
    %v1681 = vpop.f32.mrb[0].mxu0
    %1682 = vmatprep.mubr.f32.mxu0 0.0
    %1683 = vmatmul.mubr.f32.gmra.mrb[0].mxu0 %v1283
    %v1684 = vpop.f32.mrb[0].mxu0
    %v1685 = vadd.f32 %v1540, %v1684
    %v1686 = vpop.f32.mrb[0].mxu0
    %1687 = vmatprep.mubr.f32.mxu0 0.0
    %1688 = vmatmul.mubr.f32.gmra.mrb[0].mxu0 %v1285
    %v1689 = vpop.f32.mrb[0].mxu0
    %v1690 = vadd.f32 %v1545, %v1689
    %v1691 = vpop.f32.mrb[0].mxu0
    %1692 = vmatprep.mubr.f32.mxu0 0.0
    %1693 = vmatmul.mubr.f32.gmra.mrb[0].mxu0 %v1287
    %v1694 = vpop.f32.mrb[0].mxu0
    %v1695 = vadd.f32 %v1550, %v1694
    %v1696 = vpop.f32.mrb[0].mxu0
    %1697 = vmatprep.mubr.f32.mxu0 0.0
    %1698 = vmatmul.mubr.f32.gmra.mrb[0].mxu0 %v1289
    %v1699 = vpop.f32.mrb[0].mxu0
    %v1700 = vadd.f32 %v1555, %v1699
    %v1701 = vpop.f32.mrb[0].mxu0
    %1702 = vmatprep.mubr.f32.mxu0 0.0
    %1703 = vmatmul.mubr.f32.gmra.mrb[0].mxu0 %v1291
    %v1704 = vpop.f32.mrb[0].mxu0
    %v1705 = vadd.f32 %v1560, %v1704
    %v1706 = vpop.f32.mrb[0].mxu0
    %1707 = vmatprep.mubr.f32.mxu0 0.0
    %1708 = vmatmul.mubr.f32.gmra.mrb[0].mxu0 %v1293
    %v1709 = vpop.f32.mrb[0].mxu0
    %v1710 = vadd.f32 %v1565, %v1709
    %v1711 = vpop.f32.mrb[0].mxu0
    %1712 = vmatprep.mubr.f32.mxu0 0.0
    %1713 = vmatmul.mubr.f32.gmra.mrb[0].mxu0 %v1295
    %v1714 = vpop.f32.mrb[0].mxu0
    %v1715 = vadd.f32 %v1570, %v1714
    %v1716 = vpop.f32.mrb[0].mxu0
    %1717 = vmatprep.mubr.f32.mxu0 0.0
    %1718 = vmatmul.mubr.f32.gmra.mrb[0].mxu0 %v1297
    %v1719 = vpop.f32.mrb[0].mxu0
    %v1720 = vadd.f32 %v1575, %v1719
    %v1721 = vpop.f32.mrb[0].mxu0
    %1722 = vmatprep.mubr.f32.mxu0 0.0
    %1723 = vmatmul.mubr.f32.gmra.mrb[0].mxu0 %v1299
    %v1724 = vpop.f32.mrb[0].mxu0
    %v1725 = vadd.f32 %v1580, %v1724
    %v1726 = vpop.f32.mrb[0].mxu0
    %1727 = vmatprep.mubr.f32.mxu0 0.0
    %1728 = vmatmul.mubr.f32.gmra.mrb[0].mxu0 %v1301
    %v1729 = vpop.f32.mrb[0].mxu0
    %v1730 = vadd.f32 %v1585, %v1729
    %v1731 = vpop.f32.mrb[0].mxu0
    %1732 = vmatprep.mubr.f32.mxu0 0.0
    %1733 = vmatmul.mubr.f32.gmra.mrb[0].mxu0 %v1287
    %v1734 = vpop.f32.mrb[0].mxu0
    %v1735 = vadd.f32 %v1590, %v1734
    %v1736 = vpop.f32.mrb[0].mxu0
    %1737 = vdwg.mxu0
    %v1738 = vlaneseq
    %v1739 = vshrl.u32 %v1738, 7
    %v1740 = vsub.s32 0, %v1739
    %v1741 = vrot.slane %v1200, %v1740
    %v1742 = vmul.f32 %v1660, %v1741
    %v1743 = vmul.f32 %v1665, %v1741
    %v1744 = vmul.f32 %v1670, %v1741
    %v1745 = vmul.f32 %v1675, %v1741
    %v1746 = vmul.f32 %v1680, %v1741
    %v1747 = vmul.f32 %v1685, %v1741
    %v1748 = vmul.f32 %v1690, %v1741
    %v1749 = vmul.f32 %v1695, %v1741
    %v1750 = vmul.f32 %v1700, %v1741
    %v1751 = vmul.f32 %v1705, %v1741
    %v1752 = vmul.f32 %v1710, %v1741
    %v1753 = vmul.f32 %v1715, %v1741
    %v1754 = vmul.f32 %v1720, %v1741
    %v1755 = vmul.f32 %v1725, %v1741
    %v1756 = vmul.f32 %v1730, %v1741
    %v1757 = vmul.f32 %v1735, %v1741
    %v1758 = vlaneseq
    %v1759 = vshrl.u32 %v1758, 7
    %v1760 = vsub.s32 1, %v1759
    %v1761 = vrot.slane %v1200, %v1760
    %v1762 = vadd.f32 %v1742, %v1761
    %v1763 = vadd.f32 %v1743, %v1761
    %v1764 = vadd.f32 %v1744, %v1761
    %v1765 = vadd.f32 %v1745, %v1761
    %v1766 = vadd.f32 %v1746, %v1761
    %v1767 = vadd.f32 %v1747, %v1761
    %v1768 = vadd.f32 %v1748, %v1761
    %v1769 = vadd.f32 %v1749, %v1761
    %v1770 = vadd.f32 %v1750, %v1761
    %v1771 = vadd.f32 %v1751, %v1761
    %v1772 = vadd.f32 %v1752, %v1761
    %v1773 = vadd.f32 %v1753, %v1761
    %v1774 = vadd.f32 %v1754, %v1761
    %v1775 = vadd.f32 %v1755, %v1761
    %v1776 = vadd.f32 %v1756, %v1761
    %v1777 = vadd.f32 %v1757, %v1761
    %v1778 = vmax.f32 %v1762, 0.0
    %v1779 = vmax.f32 %v1763, 0.0
    %v1780 = vmax.f32 %v1764, 0.0
    %v1781 = vmax.f32 %v1765, 0.0
    %v1782 = vmax.f32 %v1766, 0.0
    %v1783 = vmax.f32 %v1767, 0.0
    %v1784 = vmax.f32 %v1768, 0.0
    %v1785 = vmax.f32 %v1769, 0.0
    %v1786 = vmax.f32 %v1770, 0.0
    %v1787 = vmax.f32 %v1771, 0.0
    %v1788 = vmax.f32 %v1772, 0.0
    %v1789 = vmax.f32 %v1773, 0.0
    %v1790 = vmax.f32 %v1774, 0.0
    %v1791 = vmax.f32 %v1775, 0.0
    %v1792 = vmax.f32 %v1776, 0.0
    %v1793 = vmax.f32 %v1777, 0.0
    %v1794 = vsel %vm1150, %v1778, 0.0
    %v1795 = vsel %vm1150, %v1779, 0.0
    %v1796 = vadd.f32 %v1794, %v1795
    %v1797 = vsel %vm1150, %v1780, 0.0
    %v1798 = vadd.f32 %v1796, %v1797
    %v1799 = vsel %vm1150, %v1781, 0.0
    %v1800 = vadd.f32 %v1798, %v1799
    %v1801 = vsel %vm1150, %v1782, 0.0
    %v1802 = vadd.f32 %v1800, %v1801
    %v1803 = vsel %vm1150, %v1783, 0.0
    %v1804 = vadd.f32 %v1802, %v1803
    %v1805 = vsel %vm1150, %v1784, 0.0
    %v1806 = vadd.f32 %v1804, %v1805
    %v1807 = vsel %vm1150, %v1785, 0.0
    %v1808 = vadd.f32 %v1806, %v1807
    %v1809 = vrot.slane %v1808, 4
    %v1810 = vadd.f32 %v1808, %v1809
    %v1811 = vrot.slane %v1810, 2
    %v1812 = vadd.f32 %v1810, %v1811
    %v1813 = vrot.slane %v1812, 1
    %v1814 = vadd.f32 %v1812, %v1813
    %v1815 = vsel %vm1150, %v1786, 0.0
    %v1816 = vsel %vm1150, %v1787, 0.0
    %v1817 = vadd.f32 %v1815, %v1816
    %v1818 = vsel %vm1150, %v1788, 0.0
    %v1819 = vadd.f32 %v1817, %v1818
    %v1820 = vsel %vm1150, %v1789, 0.0
    %v1821 = vadd.f32 %v1819, %v1820
    %v1822 = vsel %vm1150, %v1790, 0.0
    %v1823 = vadd.f32 %v1821, %v1822
    %v1824 = vsel %vm1150, %v1791, 0.0
    %v1825 = vadd.f32 %v1823, %v1824
    %v1826 = vsel %vm1150, %v1792, 0.0
    %v1827 = vadd.f32 %v1825, %v1826
    %v1828 = vsel %vm1150, %v1793, 0.0
    %v1829 = vadd.f32 %v1827, %v1828
    %v1830 = vrot.slane %v1829, 4
    %v1831 = vadd.f32 %v1829, %v1830
    %v1832 = vrot.slane %v1831, 2
    %v1833 = vadd.f32 %v1831, %v1832
    %v1834 = vrot.slane %v1833, 1
    %v1835 = vadd.f32 %v1833, %v1834
    %vm1838 = vcmask 1041409
    %v1839 = vsel %vm1838, %v1835, %v1814
    %1840 = vrot.lane.b32.xlu0 %v1839, 1
    %v1841 = vpop.permute.xlu0 %1840
    %vm1843 = vcmask 7168
    %v1844 = vsel %vm1843, 0.0, %v1841
    %1845 = vrot.lane.b32.xlu0 %v1839, 127
    %v1846 = vpop.permute.xlu0 %1845
    %vm1848 = vcmask 515072
    %v1849 = vsel %vm1848, %v1846, 0.0
    %v1850 = vld [vmem:[%s6] sm:$0x7]
    %v1851 = vlaneseq
    %v1852 = vshrl.u32 %v1851, 7
    %v1853 = vsub.s32 0, %v1852
    %v1854 = vrot.slane %v1850, %v1853
    %v1855 = vmul.f32 %v1854, %v1844
    %v1856 = vlaneseq
    %v1857 = vshrl.u32 %v1856, 7
    %v1858 = vsub.s32 1, %v1857
    %v1859 = vrot.slane %v1850, %v1858
    %v1861 = vmul.f32 %v1859, %v1839
    %v1862 = vadd.f32 %v1855, %v1861
    %v1863 = vlaneseq
    %v1864 = vshrl.u32 %v1863, 7
    %v1865 = vsub.s32 2, %v1864
    %v1866 = vrot.slane %v1850, %v1865
    %v1867 = vmul.f32 %v1866, %v1849
    %v1868 = vadd.f32 %v1862, %v1867
    %v1869 = vsub.f32 0.0, %v1868
    %v1870 = vmul.f32 %v1869, 1.442695
    %v1871 = vpow.pop %v1870
    %v1872 = vadd.f32 %v1871, 1.0
    %v1873 = vrcp.pop %v1872
    %v1874 = vmul.f32 1.0, %v1873
    %v1877 = vunpack.c.l.s4 1966171168
    %v1878 = vunpack.c.0.s8 %v1877
    %v1879 = vlaneseq
    %v1880 = vshrl.u32 %v1879, 7
    %v1881 = vsub.s32 %v1878, %v1880
    %v1882 = vrot.slane %v1874, %v1881
    %v1883 = vcombine.high %v1882, %v1882
    %v1885 = vunpack.c.l.s4 1966171168
    %v1886 = vunpack.c.0.s8 %v1885
    %v1887 = vlaneseq
    %v1888 = vshrl.u32 %v1887, 7
    %v1889 = vsub.s32 %v1886, %v1888
    %v1890 = vrot.slane %v1882, %v1889
    %v1892 = vunpack.c.l.s4 1966171168
    %v1893 = vunpack.c.0.s8 %v1892
    %v1894 = vlaneseq
    %v1895 = vshrl.u32 %v1894, 7
    %v1896 = vsub.s32 %v1893, %v1895
    %v1897 = vrot.slane %v1883, %v1896
    %v1898 = vlaneseq
    %v1899 = vshrl.u32 %v1898, 7
    %v1900 = vsub.s32 0, %v1899
    %v1901 = vrot.slane %v1890, %v1900
    %v1902 = vlaneseq
    %v1903 = vshrl.u32 %v1902, 7
    %v1904 = vsub.s32 0, %v1903
    %v1905 = vrot.slane %v1897, %v1904
    %v1908 = vmul.f32 %v1778, %v1901
    %v1909 = vmul.f32 %v1779, %v1901
    %v1910 = vmul.f32 %v1780, %v1901
    %v1911 = vmul.f32 %v1781, %v1901
    %v1912 = vmul.f32 %v1782, %v1901
    %v1913 = vmul.f32 %v1783, %v1901
    %v1914 = vmul.f32 %v1784, %v1901
    %v1915 = vmul.f32 %v1785, %v1901
    %v1916 = vmul.f32 %v1786, %v1905
    %v1917 = vmul.f32 %v1787, %v1905
    %v1918 = vmul.f32 %v1788, %v1905
    %v1919 = vmul.f32 %v1789, %v1905
    %v1920 = vmul.f32 %v1790, %v1905
    %v1921 = vmul.f32 %v1791, %v1905
    %v1922 = vmul.f32 %v1792, %v1905
    %v1923 = vmul.f32 %v1793, %v1905
    %1924 = vst.msk [vmem:[#allocation2] sm:$0xff] %vm1150, %v1908
    %1925 = vst.msk [vmem:[#allocation2 + $0x8] sm:$0xff] %vm1150, %v1909
    %1926 = vst.msk [vmem:[#allocation2 + $0x10] sm:$0xff] %vm1150, %v1910
    %1927 = vst.msk [vmem:[#allocation2 + $0x18] sm:$0xff] %vm1150, %v1911
    %1928 = vst.msk [vmem:[#allocation2 + $0x20] sm:$0xff] %vm1150, %v1912
    %1929 = vst.msk [vmem:[#allocation2 + $0x28] sm:$0xff] %vm1150, %v1913
    %1930 = vst.msk [vmem:[#allocation2 + $0x30] sm:$0xff] %vm1150, %v1914
    %1931 = vst.msk [vmem:[#allocation2 + $0x38] sm:$0xff] %vm1150, %v1915
    %1932 = vst.msk [vmem:[#allocation2 + $0x40] sm:$0xff] %vm1150, %v1916
    %1933 = vst.msk [vmem:[#allocation2 + $0x48] sm:$0xff] %vm1150, %v1917
    %1934 = vst.msk [vmem:[#allocation2 + $0x50] sm:$0xff] %vm1150, %v1918
    %1935 = vst.msk [vmem:[#allocation2 + $0x58] sm:$0xff] %vm1150, %v1919
    %1936 = vst.msk [vmem:[#allocation2 + $0x60] sm:$0xff] %vm1150, %v1920
    %1937 = vst.msk [vmem:[#allocation2 + $0x68] sm:$0xff] %vm1150, %v1921
    %1938 = vst.msk [vmem:[#allocation2 + $0x70] sm:$0xff] %vm1150, %v1922
    %1939 = vst.msk [vmem:[#allocation2 + $0x78] sm:$0xff] %vm1150, %v1923
    // Predicated region
    $region30: #{tpu_custom_call.1} parent=1 // pred_check
      _
    $region31: #{tpu_custom_call.1} parent=1 // pred_check_branch
      %1941 = sbr.rel (0) target = $region33
    $region32: #{tpu_custom_call.1} parent=1 // pred_region
      %s1943 = ssub.s32 2048, 2048
      %1944 = vsyncadd [#allocation3], %s1943
      %s1945 = sshll.u32 [#allocation2], 4
      %s1946 = int_to_ptr.vmem [resolvable:$true] %s1945
      %1951 = dma.vmem_to_hbm [thread:$0]  %s1946, 2048, %s7, [#allocation3], 128, 128, 8
    $region33: #{tpu_custom_call.1} parent=1 // pred_fallthru
      _
    // Predicated region
    $region34: #{tpu_custom_call.1} parent=1 // pred_check
      _
    $region35: #{tpu_custom_call.1} parent=1 // pred_check_branch
      %1953 = sbr.rel (0) target = $region37
    $region36: #{tpu_custom_call.1} parent=1 // pred_region
      %1954 = dma.done [#allocation3], 2048
    $region37: #{tpu_custom_call.1} parent=1 // pred_fallthru
      _
    %1955 = vsyncpa [#allocation3], 1

</llo_original>
